<compile_context>
chip_gen: v5e
topology: v5e:2x2
jax: 0.10.0
libtpu: 0.0.40
codegen_flags: <defaults>
</compile_context>

<pallas_src>
import functools

import jax
import jax.numpy as jnp
from jax.experimental import pallas as pl
from jax.experimental.pallas import tpu as pltpu


# ---------------------------------------------------------------------------
# Fused forward kernel (single program, everything VMEM-resident)
# ---------------------------------------------------------------------------
def _fused_caption_kernel(
    bb_ref,       # (B_pad, N*flat)      f32  flattened boxes, box-major columns
    cap_ref,      # (Tm1*B_pad, 1)       i32  caption ids, (t, b) row order
    wcomb_ref,    # (N*flat, H)          f32  fused encoder+lin weight
    bcomb_ref,    # (1, H)               f32  fused encoder+lin bias
    embed_ref,    # (V, E_emb)           f32  embedding table
    wx_ref,       # (E_emb, 4H)          f32  LSTM input weights (fused i|f|g|o)
    wh_ref,       # (H, 4H)              f32  LSTM hidden weights (fused)
    b_ref,        # (1, 4H)              f32  LSTM bias (fused)
    cls_w_ref,    # (H, V_pad)           f32  classifier weight, lane-padded
    cls_b_ref,    # (1, V_pad)           f32  classifier bias, lane-padded
    out_ref,      # (Tm1*B_pad, V_pad)   f32  logits, (t, b) row order
    *, B, Tm1, V, H,
):
    f32 = jnp.float32

    # ---- encoder + lin in ONE dot: initial LSTM state (h0 == c0) --------------
    lin = (
        jnp.dot(bb_ref[...], wcomb_ref[...], preferred_element_type=f32)
        + bcomb_ref[...]
    )                                                            # (B_pad, H)

    # ---- embedding lookup via one-hot matmul (table is VMEM-resident) ---------
    ids = cap_ref[...]                                           # (Tm1*B, 1) int32
    iota_v = jax.lax.broadcasted_iota(jnp.int32, (Tm1 * B, V), 1)
    onehot = (ids == iota_v).astype(f32)                         # (Tm1*B, V)
    x_all = jnp.dot(onehot, embed_ref[...], preferred_element_type=f32)  # (Tm1*B, E)

    # ---- hoisted input-side gates: one dot + one fused (1, 4H) bias add -------
    gx_all = (
        jnp.dot(x_all, wx_ref[...], preferred_element_type=f32) + b_ref[...]
    )                                                            # (Tm1*B, 4H)

    # ---- recurrence (fully unrolled; Tm1 static, one lane-dense dot per step) -
    h = lin
    c = lin
    hs = []
    for t in range(Tm1):
        lo = t * B                                               # B_pad-aligned rows
        gates = gx_all[lo:lo + B] + jnp.dot(
            h, wh_ref[...], preferred_element_type=f32
        )                                                        # (B, 4H) full vreg
        sig = jax.nn.sigmoid(gates)                              # one EUP pass
        tnh = jnp.tanh(gates)                                    # one EUP pass
        i_g = sig[:, 0 * H:1 * H]
        f_g = sig[:, 1 * H:2 * H]
        g_g = tnh[:, 2 * H:3 * H]
        o_g = sig[:, 3 * H:4 * H]
        c = f_g * c + i_g * g_g
        h = o_g * jnp.tanh(c)
        hs.append(h)

    # ---- classifier over all time steps in one matmul, lane-dense store -------
    hs_all = jnp.concatenate(hs, axis=0)                         # (Tm1*B, H)
    logits = (
        jnp.dot(hs_all, cls_w_ref[...], preferred_element_type=f32)
        + cls_b_ref[...]
    )                                                            # (Tm1*B, V_pad)
    out_ref[...] = logits.astype(out_ref.dtype)


# ---------------------------------------------------------------------------
# Wrapper: parameter re-layout (tiny XLA ops) + batch/lane padding + final permute
# ---------------------------------------------------------------------------
def bbox_caption_generator_forward(params, bounding_boxes, caption):
    B, N, C, Hi, Wi = bounding_boxes.shape
    flat = C * Hi * Wi
    E_img = params["enc_w"].shape[1]
    H = params["lin_w"].shape[1]
    V, E_emb = params["embed"].shape
    Tm1 = caption.shape[1] - 1

    SUB, LANE = 8, 128
    B_pad = ((B + SUB - 1) // SUB) * SUB
    V_pad = ((V + LANE - 1) // LANE) * LANE

    # bounding boxes -> (B, N*flat) contiguous reshape (free), batch padded to 8 rows
    bb2d = bounding_boxes.reshape(B, N * flat)
    bb2d = jnp.pad(bb2d, ((0, B_pad - B), (0, 0)))

    # caption ids, (t, b)-row order, batch padded with zeros (padded rows dropped later)
    cap_in = jnp.pad(caption[:, :-1].astype(jnp.int32), ((0, B_pad - B), (0, 0)))
    cap_flat = jnp.transpose(cap_in, (1, 0)).reshape(Tm1 * B_pad, 1)

    # fused encoder+lin weights: lin = sum_n (bb_n @ enc_w + enc_b) @ lin_w3[n]
    #                                 = bb(B, N*flat) @ W_comb + b_comb
    lin_w3 = params["lin_w"].reshape(N, E_img, H)
    w_comb = jnp.einsum("fe,neh->nfh", params["enc_w"], lin_w3).reshape(N * flat, H)
    b_comb = jnp.einsum("e,neh->h", params["enc_b"], lin_w3).reshape(1, H)

    # LSTM weights stay fused (lane-dense 4H); bias as a single (1, 4H) row
    wx = params["lstm_wx"]                       # (E_emb, 4H)
    wh = params["lstm_wh"]                       # (H, 4H)
    lstm_b = params["lstm_b"].reshape(1, 4 * H)  # (1, 4H)

    # classifier padded to a lane-dense output width
    cls_w = jnp.pad(params["cls_w"], ((0, 0), (0, V_pad - V)))
    cls_b = jnp.pad(params["cls_b"], ((0, V_pad - V),)).reshape(1, V_pad)

    kernel = functools.partial(_fused_caption_kernel, B=B_pad, Tm1=Tm1, V=V, H=H)
    vmem_spec = pl.BlockSpec(memory_space=pltpu.MemorySpace.VMEM)

    logits = pl.pallas_call(
        kernel,
        out_shape=jax.ShapeDtypeStruct((Tm1 * B_pad, V_pad), jnp.float32),
        in_specs=[vmem_spec] * 10,
        out_specs=vmem_spec,
    )(bb2d, cap_flat, w_comb, b_comb, params["embed"], wx, wh, lstm_b, cls_w, cls_b)

    # (Tm1*B_pad, V_pad) -> (Tm1, B_pad, V_pad) -> drop padding -> (B, V, Tm1)
    logits = logits.reshape(Tm1, B_pad, V_pad)[:, :B, :V]
    return jnp.transpose(logits, (1, 2, 0))


# ---------------------------------------------------------------------------
# Pure-JAX reference (for correctness check)
# ---------------------------------------------------------------------------
def reference_forward(params, bounding_boxes, caption):
    B, N, C, Hi, Wi = bounding_boxes.shape
    bb_flat = bounding_boxes.reshape(B * N, -1)
    enc = bb_flat @ params["enc_w"] + params["enc_b"]
    concatenated = enc.reshape(B, -1)
    lin = concatenated @ params["lin_w"]
    H = lin.shape[1]

    caption_in = caption[:, :-1]
    embedded = jnp.take(params["embed"], caption_in, axis=0)
    x_tbe = jnp.transpose(embedded, (1, 0, 2))

    def step(carry, x):
        h, c = carry
        gates = x @ params["lstm_wx"] + h @ params["lstm_wh"] + params["lstm_b"]
        i = jax.nn.sigmoid(gates[:, 0 * H:1 * H])
        f = jax.nn.sigmoid(gates[:, 1 * H:2 * H])
        g = jnp.tanh(gates[:, 2 * H:3 * H])
        o = jax.nn.sigmoid(gates[:, 3 * H:4 * H])
        c = f * c + i * g
        h = o * jnp.tanh(c)
        return (h, c), h

    (_, _), hs = jax.lax.scan(step, (lin, lin), x_tbe)
    hs_bt = jnp.transpose(hs, (1, 0, 2))
    logits = hs_bt @ params["cls_w"] + params["cls_b"]
    return jnp.transpose(logits, (0, 2, 1))


# ---------------------------------------------------------------------------
if __name__ == "__main__":
    # Small, forward-consistent shapes.
    B, N_BOXES = 2, 3
    C, HIMG, WIMG = 3, 16, 16
    IMG_EMB = 32          # image_embedding
    DEC_OUT = 32          # decoder_out (LSTM hidden) -> 4H = 128 lanes
    VOCAB = 16
    EMB_DIM = 16          # caption token embedding dim
    T = 8                 # caption length (forward uses caption[:, :-1])

    key = jax.random.PRNGKey(0)
    keys = jax.random.split(key, 12)
    flat_dim = C * HIMG * WIMG

    params = {
        # BoundingBoxImageEncoder: Flatten + LazyLinear(IMG_EMB) (with bias)
        "enc_w": jax.random.normal(keys[0], (flat_dim, IMG_EMB), jnp.float32) * 0.02,
        "enc_b": jax.random.normal(keys[1], (IMG_EMB,), jnp.float32) * 0.02,
        # self.lin = LazyLinear(DEC_OUT, bias=False)
        "lin_w": jax.random.normal(keys[2], (N_BOXES * IMG_EMB, DEC_OUT), jnp.float32) * 0.05,
        # caption_decoder: Embedding + LSTM + Linear classifier
        "embed": jax.random.normal(keys[3], (VOCAB, EMB_DIM), jnp.float32) * 0.1,
        "lstm_wx": jax.random.normal(keys[4], (EMB_DIM, 4 * DEC_OUT), jnp.float32) * 0.1,
        "lstm_wh": jax.random.normal(keys[5], (DEC_OUT, 4 * DEC_OUT), jnp.float32) * 0.1,
        "lstm_b": jax.random.normal(keys[6], (4 * DEC_OUT,), jnp.float32) * 0.1,
        "cls_w": jax.random.normal(keys[7], (DEC_OUT, VOCAB), jnp.float32) * 0.1,
        "cls_b": jax.random.normal(keys[8], (VOCAB,), jnp.float32) * 0.1,
    }

    bounding_boxes = jax.random.normal(
        keys[9], (B, N_BOXES, C, HIMG, WIMG), jnp.float32
    )
    caption = jax.random.randint(keys[10], (B, T), 0, VOCAB, jnp.int32)

    fwd = jax.jit(bbox_caption_generator_forward)
    out = fwd(params, bounding_boxes, caption)
    out = jax.block_until_ready(out)

    ref = reference_forward(params, bounding_boxes, caption)
    assert out.shape == (B, VOCAB, T - 1), out.shape
    assert jnp.allclose(out, ref, atol=1e-4, rtol=1e-4), float(
        jnp.max(jnp.abs(out - ref))
    )
    print("KERNEL_OK")
</pallas_src>

<mosaic_0001>
module attributes {stable_mosaic.version = 11 : i64} {
  func.func @_fused_caption_kernel(%arg0: memref<8x2304xf32, #tpu.memory_space<vmem>>, %arg1: memref<56x1xi32, #tpu.memory_space<vmem>>, %arg2: memref<2304x32xf32, #tpu.memory_space<vmem>>, %arg3: memref<1x32xf32, #tpu.memory_space<vmem>>, %arg4: memref<16x16xf32, #tpu.memory_space<vmem>>, %arg5: memref<16x128xf32, #tpu.memory_space<vmem>>, %arg6: memref<32x128xf32, #tpu.memory_space<vmem>>, %arg7: memref<1x128xf32, #tpu.memory_space<vmem>>, %arg8: memref<32x128xf32, #tpu.memory_space<vmem>>, %arg9: memref<1x128xf32, #tpu.memory_space<vmem>>, %arg10: memref<56x128xf32, #tpu.memory_space<vmem>>) attributes {dimension_semantics = [], scalar_prefetch = 0 : i64, scratch_operands = 0 : i64, tpu.core_type = #tpu.core_type<tc>} {
    %c0 = arith.constant 0 : index
    %c0_0 = arith.constant 0 : index
    %0 = vector.load %arg0[%c0, %c0_0] : memref<8x2304xf32, #tpu.memory_space<vmem>>, vector<8x2304xf32>
    %c0_1 = arith.constant 0 : index
    %c0_2 = arith.constant 0 : index
    %1 = vector.load %arg2[%c0_1, %c0_2] : memref<2304x32xf32, #tpu.memory_space<vmem>>, vector<2304x32xf32>
    %cst = arith.constant dense<0.000000e+00> : vector<8x32xf32>
    %2 = tpu.matmul %0, %1, %cst {dimension_numbers = #tpu.dot_dimension_numbers<[1], [0], [0], [1], [0, 0, 1, 1], [], []>} : vector<8x2304xf32>, vector<2304x32xf32>, vector<8x32xf32> -> vector<8x32xf32>
    %c0_3 = arith.constant 0 : index
    %c0_4 = arith.constant 0 : index
    %3 = vector.load %arg3[%c0_3, %c0_4] : memref<1x32xf32, #tpu.memory_space<vmem>>, vector<1x32xf32>
    %4 = vector.broadcast %3 : vector<1x32xf32> to vector<8x32xf32>
    %5 = arith.addf %2, %4 : vector<8x32xf32>
    %c0_5 = arith.constant 0 : index
    %c0_6 = arith.constant 0 : index
    %6 = vector.load %arg1[%c0_5, %c0_6] : memref<56x1xi32, #tpu.memory_space<vmem>>, vector<56x1xi32>
    %7 = tpu.iota {dimensions = array<i32: 1>} : vector<56x16xi32>
    %8 = vector.broadcast %6 : vector<56x1xi32> to vector<56x16xi32>
    %9 = arith.cmpi eq, %8, %7 : vector<56x16xi32>
    %10 = arith.extui %9 : vector<56x16xi1> to vector<56x16xi32>
    %11 = arith.sitofp %10 : vector<56x16xi32> to vector<56x16xf32>
    %c0_7 = arith.constant 0 : index
    %c0_8 = arith.constant 0 : index
    %12 = vector.load %arg4[%c0_7, %c0_8] : memref<16x16xf32, #tpu.memory_space<vmem>>, vector<16x16xf32>
    %cst_9 = arith.constant dense<0.000000e+00> : vector<56x16xf32>
    %13 = tpu.matmul %11, %12, %cst_9 {dimension_numbers = #tpu.dot_dimension_numbers<[1], [0], [0], [1], [0, 0, 1, 1], [], []>} : vector<56x16xf32>, vector<16x16xf32>, vector<56x16xf32> -> vector<56x16xf32>
    %c0_10 = arith.constant 0 : index
    %c0_11 = arith.constant 0 : index
    %14 = vector.load %arg5[%c0_10, %c0_11] : memref<16x128xf32, #tpu.memory_space<vmem>>, vector<16x128xf32>
    %cst_12 = arith.constant dense<0.000000e+00> : vector<56x128xf32>
    %15 = tpu.matmul %13, %14, %cst_12 {dimension_numbers = #tpu.dot_dimension_numbers<[1], [0], [0], [1], [0, 0, 1, 1], [], []>} : vector<56x16xf32>, vector<16x128xf32>, vector<56x128xf32> -> vector<56x128xf32>
    %c0_13 = arith.constant 0 : index
    %c0_14 = arith.constant 0 : index
    %16 = vector.load %arg7[%c0_13, %c0_14] : memref<1x128xf32, #tpu.memory_space<vmem>>, vector<1x128xf32>
    %17 = vector.broadcast %16 : vector<1x128xf32> to vector<56x128xf32>
    %18 = arith.addf %15, %17 : vector<56x128xf32>
    %19 = vector.extract_strided_slice %18 {offsets = [0, 0], sizes = [8, 128], strides = [1, 1]} : vector<56x128xf32> to vector<8x128xf32>
    %c0_15 = arith.constant 0 : index
    %c0_16 = arith.constant 0 : index
    %20 = vector.load %arg6[%c0_15, %c0_16] : memref<32x128xf32, #tpu.memory_space<vmem>>, vector<32x128xf32>
    %cst_17 = arith.constant dense<0.000000e+00> : vector<8x128xf32>
    %21 = tpu.matmul %5, %20, %cst_17 {dimension_numbers = #tpu.dot_dimension_numbers<[1], [0], [0], [1], [0, 0, 1, 1], [], []>} : vector<8x32xf32>, vector<32x128xf32>, vector<8x128xf32> -> vector<8x128xf32>
    %22 = arith.addf %19, %21 : vector<8x128xf32>
    %23 = arith.negf %22 : vector<8x128xf32>
    %24 = math.exp %23 : vector<8x128xf32>
    %cst_18 = arith.constant 1.000000e+00 : f32
    %25 = vector.broadcast %cst_18 : f32 to vector<8x128xf32>
    %26 = arith.addf %25, %24 : vector<8x128xf32>
    %27 = arith.divf %25, %26 : vector<8x128xf32>
    %28 = math.tanh %22 : vector<8x128xf32>
    %29 = vector.extract_strided_slice %27 {offsets = [0, 0], sizes = [8, 32], strides = [1, 1]} : vector<8x128xf32> to vector<8x32xf32>
    %30 = vector.extract_strided_slice %27 {offsets = [0, 32], sizes = [8, 32], strides = [1, 1]} : vector<8x128xf32> to vector<8x32xf32>
    %31 = vector.extract_strided_slice %28 {offsets = [0, 64], sizes = [8, 32], strides = [1, 1]} : vector<8x128xf32> to vector<8x32xf32>
    %32 = vector.extract_strided_slice %27 {offsets = [0, 96], sizes = [8, 32], strides = [1, 1]} : vector<8x128xf32> to vector<8x32xf32>
    %33 = arith.mulf %30, %5 : vector<8x32xf32>
    %34 = arith.mulf %29, %31 : vector<8x32xf32>
    %35 = arith.addf %33, %34 : vector<8x32xf32>
    %36 = math.tanh %35 : vector<8x32xf32>
    %37 = arith.mulf %32, %36 : vector<8x32xf32>
    %38 = vector.extract_strided_slice %18 {offsets = [8, 0], sizes = [8, 128], strides = [1, 1]} : vector<56x128xf32> to vector<8x128xf32>
    %c0_19 = arith.constant 0 : index
    %c0_20 = arith.constant 0 : index
    %39 = vector.load %arg6[%c0_19, %c0_20] : memref<32x128xf32, #tpu.memory_space<vmem>>, vector<32x128xf32>
    %cst_21 = arith.constant dense<0.000000e+00> : vector<8x128xf32>
    %40 = tpu.matmul %37, %39, %cst_21 {dimension_numbers = #tpu.dot_dimension_numbers<[1], [0], [0], [1], [0, 0, 1, 1], [], []>} : vector<8x32xf32>, vector<32x128xf32>, vector<8x128xf32> -> vector<8x128xf32>
    %41 = arith.addf %38, %40 : vector<8x128xf32>
    %42 = arith.negf %41 : vector<8x128xf32>
    %43 = math.exp %42 : vector<8x128xf32>
    %cst_22 = arith.constant 1.000000e+00 : f32
    %44 = vector.broadcast %cst_22 : f32 to vector<8x128xf32>
    %45 = arith.addf %44, %43 : vector<8x128xf32>
    %46 = arith.divf %44, %45 : vector<8x128xf32>
    %47 = math.tanh %41 : vector<8x128xf32>
    %48 = vector.extract_strided_slice %46 {offsets = [0, 0], sizes = [8, 32], strides = [1, 1]} : vector<8x128xf32> to vector<8x32xf32>
    %49 = vector.extract_strided_slice %46 {offsets = [0, 32], sizes = [8, 32], strides = [1, 1]} : vector<8x128xf32> to vector<8x32xf32>
    %50 = vector.extract_strided_slice %47 {offsets = [0, 64], sizes = [8, 32], strides = [1, 1]} : vector<8x128xf32> to vector<8x32xf32>
    %51 = vector.extract_strided_slice %46 {offsets = [0, 96], sizes = [8, 32], strides = [1, 1]} : vector<8x128xf32> to vector<8x32xf32>
    %52 = arith.mulf %49, %35 : vector<8x32xf32>
    %53 = arith.mulf %48, %50 : vector<8x32xf32>
    %54 = arith.addf %52, %53 : vector<8x32xf32>
    %55 = math.tanh %54 : vector<8x32xf32>
    %56 = arith.mulf %51, %55 : vector<8x32xf32>
    %57 = vector.extract_strided_slice %18 {offsets = [16, 0], sizes = [8, 128], strides = [1, 1]} : vector<56x128xf32> to vector<8x128xf32>
    %c0_23 = arith.constant 0 : index
    %c0_24 = arith.constant 0 : index
    %58 = vector.load %arg6[%c0_23, %c0_24] : memref<32x128xf32, #tpu.memory_space<vmem>>, vector<32x128xf32>
    %cst_25 = arith.constant dense<0.000000e+00> : vector<8x128xf32>
    %59 = tpu.matmul %56, %58, %cst_25 {dimension_numbers = #tpu.dot_dimension_numbers<[1], [0], [0], [1], [0, 0, 1, 1], [], []>} : vector<8x32xf32>, vector<32x128xf32>, vector<8x128xf32> -> vector<8x128xf32>
    %60 = arith.addf %57, %59 : vector<8x128xf32>
    %61 = arith.negf %60 : vector<8x128xf32>
    %62 = math.exp %61 : vector<8x128xf32>
    %cst_26 = arith.constant 1.000000e+00 : f32
    %63 = vector.broadcast %cst_26 : f32 to vector<8x128xf32>
    %64 = arith.addf %63, %62 : vector<8x128xf32>
    %65 = arith.divf %63, %64 : vector<8x128xf32>
    %66 = math.tanh %60 : vector<8x128xf32>
    %67 = vector.extract_strided_slice %65 {offsets = [0, 0], sizes = [8, 32], strides = [1, 1]} : vector<8x128xf32> to vector<8x32xf32>
    %68 = vector.extract_strided_slice %65 {offsets = [0, 32], sizes = [8, 32], strides = [1, 1]} : vector<8x128xf32> to vector<8x32xf32>
    %69 = vector.extract_strided_slice %66 {offsets = [0, 64], sizes = [8, 32], strides = [1, 1]} : vector<8x128xf32> to vector<8x32xf32>
    %70 = vector.extract_strided_slice %65 {offsets = [0, 96], sizes = [8, 32], strides = [1, 1]} : vector<8x128xf32> to vector<8x32xf32>
    %71 = arith.mulf %68, %54 : vector<8x32xf32>
    %72 = arith.mulf %67, %69 : vector<8x32xf32>
    %73 = arith.addf %71, %72 : vector<8x32xf32>
    %74 = math.tanh %73 : vector<8x32xf32>
    %75 = arith.mulf %70, %74 : vector<8x32xf32>
    %76 = vector.extract_strided_slice %18 {offsets = [24, 0], sizes = [8, 128], strides = [1, 1]} : vector<56x128xf32> to vector<8x128xf32>
    %c0_27 = arith.constant 0 : index
    %c0_28 = arith.constant 0 : index
    %77 = vector.load %arg6[%c0_27, %c0_28] : memref<32x128xf32, #tpu.memory_space<vmem>>, vector<32x128xf32>
    %cst_29 = arith.constant dense<0.000000e+00> : vector<8x128xf32>
    %78 = tpu.matmul %75, %77, %cst_29 {dimension_numbers = #tpu.dot_dimension_numbers<[1], [0], [0], [1], [0, 0, 1, 1], [], []>} : vector<8x32xf32>, vector<32x128xf32>, vector<8x128xf32> -> vector<8x128xf32>
    %79 = arith.addf %76, %78 : vector<8x128xf32>
    %80 = arith.negf %79 : vector<8x128xf32>
    %81 = math.exp %80 : vector<8x128xf32>
    %cst_30 = arith.constant 1.000000e+00 : f32
    %82 = vector.broadcast %cst_30 : f32 to vector<8x128xf32>
    %83 = arith.addf %82, %81 : vector<8x128xf32>
    %84 = arith.divf %82, %83 : vector<8x128xf32>
    %85 = math.tanh %79 : vector<8x128xf32>
    %86 = vector.extract_strided_slice %84 {offsets = [0, 0], sizes = [8, 32], strides = [1, 1]} : vector<8x128xf32> to vector<8x32xf32>
    %87 = vector.extract_strided_slice %84 {offsets = [0, 32], sizes = [8, 32], strides = [1, 1]} : vector<8x128xf32> to vector<8x32xf32>
    %88 = vector.extract_strided_slice %85 {offsets = [0, 64], sizes = [8, 32], strides = [1, 1]} : vector<8x128xf32> to vector<8x32xf32>
    %89 = vector.extract_strided_slice %84 {offsets = [0, 96], sizes = [8, 32], strides = [1, 1]} : vector<8x128xf32> to vector<8x32xf32>
    %90 = arith.mulf %87, %73 : vector<8x32xf32>
    %91 = arith.mulf %86, %88 : vector<8x32xf32>
    %92 = arith.addf %90, %91 : vector<8x32xf32>
    %93 = math.tanh %92 : vector<8x32xf32>
    %94 = arith.mulf %89, %93 : vector<8x32xf32>
    %95 = vector.extract_strided_slice %18 {offsets = [32, 0], sizes = [8, 128], strides = [1, 1]} : vector<56x128xf32> to vector<8x128xf32>
    %c0_31 = arith.constant 0 : index
    %c0_32 = arith.constant 0 : index
    %96 = vector.load %arg6[%c0_31, %c0_32] : memref<32x128xf32, #tpu.memory_space<vmem>>, vector<32x128xf32>
    %cst_33 = arith.constant dense<0.000000e+00> : vector<8x128xf32>
    %97 = tpu.matmul %94, %96, %cst_33 {dimension_numbers = #tpu.dot_dimension_numbers<[1], [0], [0], [1], [0, 0, 1, 1], [], []>} : vector<8x32xf32>, vector<32x128xf32>, vector<8x128xf32> -> vector<8x128xf32>
    %98 = arith.addf %95, %97 : vector<8x128xf32>
    %99 = arith.negf %98 : vector<8x128xf32>
    %100 = math.exp %99 : vector<8x128xf32>
    %cst_34 = arith.constant 1.000000e+00 : f32
    %101 = vector.broadcast %cst_34 : f32 to vector<8x128xf32>
    %102 = arith.addf %101, %100 : vector<8x128xf32>
    %103 = arith.divf %101, %102 : vector<8x128xf32>
    %104 = math.tanh %98 : vector<8x128xf32>
    %105 = vector.extract_strided_slice %103 {offsets = [0, 0], sizes = [8, 32], strides = [1, 1]} : vector<8x128xf32> to vector<8x32xf32>
    %106 = vector.extract_strided_slice %103 {offsets = [0, 32], sizes = [8, 32], strides = [1, 1]} : vector<8x128xf32> to vector<8x32xf32>
    %107 = vector.extract_strided_slice %104 {offsets = [0, 64], sizes = [8, 32], strides = [1, 1]} : vector<8x128xf32> to vector<8x32xf32>
    %108 = vector.extract_strided_slice %103 {offsets = [0, 96], sizes = [8, 32], strides = [1, 1]} : vector<8x128xf32> to vector<8x32xf32>
    %109 = arith.mulf %106, %92 : vector<8x32xf32>
    %110 = arith.mulf %105, %107 : vector<8x32xf32>
    %111 = arith.addf %109, %110 : vector<8x32xf32>
    %112 = math.tanh %111 : vector<8x32xf32>
    %113 = arith.mulf %108, %112 : vector<8x32xf32>
    %114 = vector.extract_strided_slice %18 {offsets = [40, 0], sizes = [8, 128], strides = [1, 1]} : vector<56x128xf32> to vector<8x128xf32>
    %c0_35 = arith.constant 0 : index
    %c0_36 = arith.constant 0 : index
    %115 = vector.load %arg6[%c0_35, %c0_36] : memref<32x128xf32, #tpu.memory_space<vmem>>, vector<32x128xf32>
    %cst_37 = arith.constant dense<0.000000e+00> : vector<8x128xf32>
    %116 = tpu.matmul %113, %115, %cst_37 {dimension_numbers = #tpu.dot_dimension_numbers<[1], [0], [0], [1], [0, 0, 1, 1], [], []>} : vector<8x32xf32>, vector<32x128xf32>, vector<8x128xf32> -> vector<8x128xf32>
    %117 = arith.addf %114, %116 : vector<8x128xf32>
    %118 = arith.negf %117 : vector<8x128xf32>
    %119 = math.exp %118 : vector<8x128xf32>
    %cst_38 = arith.constant 1.000000e+00 : f32
    %120 = vector.broadcast %cst_38 : f32 to vector<8x128xf32>
    %121 = arith.addf %120, %119 : vector<8x128xf32>
    %122 = arith.divf %120, %121 : vector<8x128xf32>
    %123 = math.tanh %117 : vector<8x128xf32>
    %124 = vector.extract_strided_slice %122 {offsets = [0, 0], sizes = [8, 32], strides = [1, 1]} : vector<8x128xf32> to vector<8x32xf32>
    %125 = vector.extract_strided_slice %122 {offsets = [0, 32], sizes = [8, 32], strides = [1, 1]} : vector<8x128xf32> to vector<8x32xf32>
    %126 = vector.extract_strided_slice %123 {offsets = [0, 64], sizes = [8, 32], strides = [1, 1]} : vector<8x128xf32> to vector<8x32xf32>
    %127 = vector.extract_strided_slice %122 {offsets = [0, 96], sizes = [8, 32], strides = [1, 1]} : vector<8x128xf32> to vector<8x32xf32>
    %128 = arith.mulf %125, %111 : vector<8x32xf32>
    %129 = arith.mulf %124, %126 : vector<8x32xf32>
    %130 = arith.addf %128, %129 : vector<8x32xf32>
    %131 = math.tanh %130 : vector<8x32xf32>
    %132 = arith.mulf %127, %131 : vector<8x32xf32>
    %133 = vector.extract_strided_slice %18 {offsets = [48, 0], sizes = [8, 128], strides = [1, 1]} : vector<56x128xf32> to vector<8x128xf32>
    %c0_39 = arith.constant 0 : index
    %c0_40 = arith.constant 0 : index
    %134 = vector.load %arg6[%c0_39, %c0_40] : memref<32x128xf32, #tpu.memory_space<vmem>>, vector<32x128xf32>
    %cst_41 = arith.constant dense<0.000000e+00> : vector<8x128xf32>
    %135 = tpu.matmul %132, %134, %cst_41 {dimension_numbers = #tpu.dot_dimension_numbers<[1], [0], [0], [1], [0, 0, 1, 1], [], []>} : vector<8x32xf32>, vector<32x128xf32>, vector<8x128xf32> -> vector<8x128xf32>
    %136 = arith.addf %133, %135 : vector<8x128xf32>
    %137 = arith.negf %136 : vector<8x128xf32>
    %138 = math.exp %137 : vector<8x128xf32>
    %cst_42 = arith.constant 1.000000e+00 : f32
    %139 = vector.broadcast %cst_42 : f32 to vector<8x128xf32>
    %140 = arith.addf %139, %138 : vector<8x128xf32>
    %141 = arith.divf %139, %140 : vector<8x128xf32>
    %142 = math.tanh %136 : vector<8x128xf32>
    %143 = vector.extract_strided_slice %141 {offsets = [0, 0], sizes = [8, 32], strides = [1, 1]} : vector<8x128xf32> to vector<8x32xf32>
    %144 = vector.extract_strided_slice %141 {offsets = [0, 32], sizes = [8, 32], strides = [1, 1]} : vector<8x128xf32> to vector<8x32xf32>
    %145 = vector.extract_strided_slice %142 {offsets = [0, 64], sizes = [8, 32], strides = [1, 1]} : vector<8x128xf32> to vector<8x32xf32>
    %146 = vector.extract_strided_slice %141 {offsets = [0, 96], sizes = [8, 32], strides = [1, 1]} : vector<8x128xf32> to vector<8x32xf32>
    %147 = arith.mulf %144, %130 : vector<8x32xf32>
    %148 = arith.mulf %143, %145 : vector<8x32xf32>
    %149 = arith.addf %147, %148 : vector<8x32xf32>
    %150 = math.tanh %149 : vector<8x32xf32>
    %151 = arith.mulf %146, %150 : vector<8x32xf32>
    %152 = tpu.concatenate %37, %56, %75, %94, %113, %132, %151 in 0 : vector<8x32xf32>, vector<8x32xf32>, vector<8x32xf32>, vector<8x32xf32>, vector<8x32xf32>, vector<8x32xf32>, vector<8x32xf32> -> vector<56x32xf32>
    %c0_43 = arith.constant 0 : index
    %c0_44 = arith.constant 0 : index
    %153 = vector.load %arg8[%c0_43, %c0_44] : memref<32x128xf32, #tpu.memory_space<vmem>>, vector<32x128xf32>
    %cst_45 = arith.constant dense<0.000000e+00> : vector<56x128xf32>
    %154 = tpu.matmul %152, %153, %cst_45 {dimension_numbers = #tpu.dot_dimension_numbers<[1], [0], [0], [1], [0, 0, 1, 1], [], []>} : vector<56x32xf32>, vector<32x128xf32>, vector<56x128xf32> -> vector<56x128xf32>
    %c0_46 = arith.constant 0 : index
    %c0_47 = arith.constant 0 : index
    %155 = vector.load %arg9[%c0_46, %c0_47] : memref<1x128xf32, #tpu.memory_space<vmem>>, vector<1x128xf32>
    %156 = vector.broadcast %155 : vector<1x128xf32> to vector<56x128xf32>
    %157 = arith.addf %154, %156 : vector<56x128xf32>
    %c0_48 = arith.constant 0 : index
    %c0_49 = arith.constant 0 : index
    %158 = vector.load %arg10[%c0_48, %c0_49] : memref<56x128xf32, #tpu.memory_space<vmem>>, vector<56x128xf32>
    tpu.vector_store %arg10[%c0_48, %c0_49], %157 {strides = array<i32>} : memref<56x128xf32, #tpu.memory_space<vmem>>, vector<56x128xf32>,
    return
  }
}

</mosaic_0001>

<llo_original>
// kernel: bbox_caption_generator_forward.1
$region0: #{bbox_caption_generator_forward.1}
  #allocation0 [shape = 'u32[]', space=smem, size = 0x4, offset = 0x4, fixed_abs, tag = 'smem constant byte address 0x4 - core index']
  #allocation1 [shape = 'u32[72,128]{1,0:T(1,128)}', space=vmem, size = 0x9000, scoped, tag = 'internal scratch']
  %s0 = inlined_call_operand.vmem [shape: f32[8,2304], index: 0, kind: input, shape index: {}]
  %s1 = inlined_call_operand.vmem [shape: s32[56,1], index: 1, kind: input, shape index: {}]
  %s2 = inlined_call_operand.vmem [shape: f32[2304,32], index: 2, kind: input, shape index: {}]
  %s3 = inlined_call_operand.vmem [shape: f32[1,32], index: 3, kind: input, shape index: {}]
  %s4 = inlined_call_operand.vmem [shape: f32[16,16], index: 4, kind: input, shape index: {}]
  %s5 = inlined_call_operand.vmem [shape: f32[16,128], index: 5, kind: input, shape index: {}]
  %s6 = inlined_call_operand.vmem [shape: f32[32,128], index: 6, kind: input, shape index: {}]
  %s7 = inlined_call_operand.vmem [shape: f32[1,128], index: 7, kind: input, shape index: {}]
  %s8 = inlined_call_operand.vmem [shape: f32[32,128], index: 8, kind: input, shape index: {}]
  %s9 = inlined_call_operand.vmem [shape: f32[1,128], index: 9, kind: input, shape index: {}]
  %s10 = inlined_call_operand.vmem [shape: f32[56,128], index: 10, kind: output, shape index: {}]
  %s11 = sld [smem:[#allocation0]]
  $region50: #{bbox_caption_generator_forward.1} parent=0
    _
  %s13 = ssub.s32 1, %s11
  %s14 = scalar_select 0, %s13, %s11
  // Predicated region
  $region2: #{bbox_caption_generator_forward.1} parent=0 // pred_check
    _
  $region3: #{bbox_caption_generator_forward.1} parent=0 // pred_check_branch
    %16 = sbr.rel (0) target = $region5
  $region4: #{bbox_caption_generator_forward.1} parent=0 // pred_region
    _
  $region5: #{bbox_caption_generator_forward.1} parent=0 // pred_fallthru
    _
  // Predicated region
  $region6: #{bbox_caption_generator_forward.1} parent=0 // pred_check
    _
  $region7: #{bbox_caption_generator_forward.1} parent=0 // pred_check_branch
    %18 = sbr.rel (0) target = $region9
  $region8: #{bbox_caption_generator_forward.1} parent=0 // pred_region
    _
  $region9: #{bbox_caption_generator_forward.1} parent=0 // pred_fallthru
    _
  // Predicated region
  $region10: #{bbox_caption_generator_forward.1} parent=0 // pred_check
    _
  $region11: #{bbox_caption_generator_forward.1} parent=0 // pred_check_branch
    %20 = sbr.rel (0) target = $region13
  $region12: #{bbox_caption_generator_forward.1} parent=0 // pred_region
    _
  $region13: #{bbox_caption_generator_forward.1} parent=0 // pred_fallthru
    _
  // Predicated region
  $region14: #{bbox_caption_generator_forward.1} parent=0 // pred_check
    _
  $region15: #{bbox_caption_generator_forward.1} parent=0 // pred_check_branch
    %22 = sbr.rel (0) target = $region17
  $region16: #{bbox_caption_generator_forward.1} parent=0 // pred_region
    _
  $region17: #{bbox_caption_generator_forward.1} parent=0 // pred_fallthru
    _
  // Predicated region
  $region18: #{bbox_caption_generator_forward.1} parent=0 // pred_check
    _
  $region19: #{bbox_caption_generator_forward.1} parent=0 // pred_check_branch
    %24 = sbr.rel (0) target = $region21
  $region20: #{bbox_caption_generator_forward.1} parent=0 // pred_region
    _
  $region21: #{bbox_caption_generator_forward.1} parent=0 // pred_fallthru
    _
  // Predicated region
  $region22: #{bbox_caption_generator_forward.1} parent=0 // pred_check
    _
  $region23: #{bbox_caption_generator_forward.1} parent=0 // pred_check_branch
    %26 = sbr.rel (0) target = $region25
  $region24: #{bbox_caption_generator_forward.1} parent=0 // pred_region
    _
  $region25: #{bbox_caption_generator_forward.1} parent=0 // pred_fallthru
    _
  // Predicated region
  $region26: #{bbox_caption_generator_forward.1} parent=0 // pred_check
    _
  $region27: #{bbox_caption_generator_forward.1} parent=0 // pred_check_branch
    %28 = sbr.rel (0) target = $region29
  $region28: #{bbox_caption_generator_forward.1} parent=0 // pred_region
    _
  $region29: #{bbox_caption_generator_forward.1} parent=0 // pred_fallthru
    _
  // Predicated region
  $region30: #{bbox_caption_generator_forward.1} parent=0 // pred_check
    _
  $region31: #{bbox_caption_generator_forward.1} parent=0 // pred_check_branch
    %30 = sbr.rel (0) target = $region33
  $region32: #{bbox_caption_generator_forward.1} parent=0 // pred_region
    _
  $region33: #{bbox_caption_generator_forward.1} parent=0 // pred_fallthru
    _
  // Predicated region
  $region34: #{bbox_caption_generator_forward.1} parent=0 // pred_check
    _
  $region35: #{bbox_caption_generator_forward.1} parent=0 // pred_check_branch
    %32 = sbr.rel (0) target = $region37
  $region36: #{bbox_caption_generator_forward.1} parent=0 // pred_region
    _
  $region37: #{bbox_caption_generator_forward.1} parent=0 // pred_fallthru
    _
  // Predicated region
  $region38: #{bbox_caption_generator_forward.1} parent=0 // pred_check
    _
  $region39: #{bbox_caption_generator_forward.1} parent=0 // pred_check_branch
    %34 = sbr.rel (0) target = $region41
  $region40: #{bbox_caption_generator_forward.1} parent=0 // pred_region
    _
  $region41: #{bbox_caption_generator_forward.1} parent=0 // pred_fallthru
    _
  %v35 = vld [vmem:[%s0] sm:$0xff]
  %v36 = vld [vmem:[%s0 + $0x8] sm:$0xff]
  %v37 = vld [vmem:[%s0 + $0x10] sm:$0xff]
  %v38 = vld [vmem:[%s0 + $0x18] sm:$0xff]
  %v39 = vld [vmem:[%s0 + $0x20] sm:$0xff]
  %v40 = vld [vmem:[%s0 + $0x28] sm:$0xff]
  %v41 = vld [vmem:[%s0 + $0x30] sm:$0xff]
  %v42 = vld [vmem:[%s0 + $0x38] sm:$0xff]
  %v43 = vld [vmem:[%s0 + $0x40] sm:$0xff]
  %v44 = vld [vmem:[%s0 + $0x48] sm:$0xff]
  %v45 = vld [vmem:[%s0 + $0x50] sm:$0xff]
  %v46 = vld [vmem:[%s0 + $0x58] sm:$0xff]
  %v47 = vld [vmem:[%s0 + $0x60] sm:$0xff]
  %v48 = vld [vmem:[%s0 + $0x68] sm:$0xff]
  %v49 = vld [vmem:[%s0 + $0x70] sm:$0xff]
  %v50 = vld [vmem:[%s0 + $0x78] sm:$0xff]
  %v51 = vld [vmem:[%s0 + $0x80] sm:$0xff]
  %v52 = vld [vmem:[%s0 + $0x88] sm:$0xff]
  %v53 = vld [vmem:[%s2] sm:$0xff]
  %v54 = vld [vmem:[%s2 + $0x8] sm:$0xff]
  %v55 = vld [vmem:[%s2 + $0x10] sm:$0xff]
  %v56 = vld [vmem:[%s2 + $0x18] sm:$0xff]
  %v57 = vld [vmem:[%s2 + $0x20] sm:$0xff]
  %v58 = vld [vmem:[%s2 + $0x28] sm:$0xff]
  %v59 = vld [vmem:[%s2 + $0x30] sm:$0xff]
  %v60 = vld [vmem:[%s2 + $0x38] sm:$0xff]
  %v61 = vld [vmem:[%s2 + $0x40] sm:$0xff]
  %v62 = vld [vmem:[%s2 + $0x48] sm:$0xff]
  %v63 = vld [vmem:[%s2 + $0x50] sm:$0xff]
  %v64 = vld [vmem:[%s2 + $0x58] sm:$0xff]
  %v65 = vld [vmem:[%s2 + $0x60] sm:$0xff]
  %v66 = vld [vmem:[%s2 + $0x68] sm:$0xff]
  %v67 = vld [vmem:[%s2 + $0x70] sm:$0xff]
  %v68 = vld [vmem:[%s2 + $0x78] sm:$0xff]
  %v69 = vld [vmem:[%s2 + $0x80] sm:$0xff]
  %v70 = vld [vmem:[%s2 + $0x88] sm:$0xff]
  %v71 = vld [vmem:[%s2 + $0x90] sm:$0xff]
  %v72 = vld [vmem:[%s2 + $0x98] sm:$0xff]
  %v73 = vld [vmem:[%s2 + $0xa0] sm:$0xff]
  %v74 = vld [vmem:[%s2 + $0xa8] sm:$0xff]
  %v75 = vld [vmem:[%s2 + $0xb0] sm:$0xff]
  %v76 = vld [vmem:[%s2 + $0xb8] sm:$0xff]
  %v77 = vld [vmem:[%s2 + $0xc0] sm:$0xff]
  %v78 = vld [vmem:[%s2 + $0xc8] sm:$0xff]
  %v79 = vld [vmem:[%s2 + $0xd0] sm:$0xff]
  %v80 = vld [vmem:[%s2 + $0xd8] sm:$0xff]
  %v81 = vld [vmem:[%s2 + $0xe0] sm:$0xff]
  %v82 = vld [vmem:[%s2 + $0xe8] sm:$0xff]
  %v83 = vld [vmem:[%s2 + $0xf0] sm:$0xff]
  %v84 = vld [vmem:[%s2 + $0xf8] sm:$0xff]
  %v85 = vld [vmem:[%s2 + $0x100] sm:$0xff]
  %v86 = vld [vmem:[%s2 + $0x108] sm:$0xff]
  %v87 = vld [vmem:[%s2 + $0x110] sm:$0xff]
  %v88 = vld [vmem:[%s2 + $0x118] sm:$0xff]
  %v89 = vld [vmem:[%s2 + $0x120] sm:$0xff]
  %v90 = vld [vmem:[%s2 + $0x128] sm:$0xff]
  %v91 = vld [vmem:[%s2 + $0x130] sm:$0xff]
  %v92 = vld [vmem:[%s2 + $0x138] sm:$0xff]
  %v93 = vld [vmem:[%s2 + $0x140] sm:$0xff]
  %v94 = vld [vmem:[%s2 + $0x148] sm:$0xff]
  %v95 = vld [vmem:[%s2 + $0x150] sm:$0xff]
  %v96 = vld [vmem:[%s2 + $0x158] sm:$0xff]
  %v97 = vld [vmem:[%s2 + $0x160] sm:$0xff]
  %v98 = vld [vmem:[%s2 + $0x168] sm:$0xff]
  %v99 = vld [vmem:[%s2 + $0x170] sm:$0xff]
  %v100 = vld [vmem:[%s2 + $0x178] sm:$0xff]
  %v101 = vld [vmem:[%s2 + $0x180] sm:$0xff]
  %v102 = vld [vmem:[%s2 + $0x188] sm:$0xff]
  %v103 = vld [vmem:[%s2 + $0x190] sm:$0xff]
  %v104 = vld [vmem:[%s2 + $0x198] sm:$0xff]
  %v105 = vld [vmem:[%s2 + $0x1a0] sm:$0xff]
  %v106 = vld [vmem:[%s2 + $0x1a8] sm:$0xff]
  %v107 = vld [vmem:[%s2 + $0x1b0] sm:$0xff]
  %v108 = vld [vmem:[%s2 + $0x1b8] sm:$0xff]
  %v109 = vld [vmem:[%s2 + $0x1c0] sm:$0xff]
  %v110 = vld [vmem:[%s2 + $0x1c8] sm:$0xff]
  %v111 = vld [vmem:[%s2 + $0x1d0] sm:$0xff]
  %v112 = vld [vmem:[%s2 + $0x1d8] sm:$0xff]
  %v113 = vld [vmem:[%s2 + $0x1e0] sm:$0xff]
  %v114 = vld [vmem:[%s2 + $0x1e8] sm:$0xff]
  %v115 = vld [vmem:[%s2 + $0x1f0] sm:$0xff]
  %v116 = vld [vmem:[%s2 + $0x1f8] sm:$0xff]
  %v117 = vld [vmem:[%s2 + $0x200] sm:$0xff]
  %v118 = vld [vmem:[%s2 + $0x208] sm:$0xff]
  %v119 = vld [vmem:[%s2 + $0x210] sm:$0xff]
  %v120 = vld [vmem:[%s2 + $0x218] sm:$0xff]
  %v121 = vld [vmem:[%s2 + $0x220] sm:$0xff]
  %v122 = vld [vmem:[%s2 + $0x228] sm:$0xff]
  %v123 = vld [vmem:[%s2 + $0x230] sm:$0xff]
  %v124 = vld [vmem:[%s2 + $0x238] sm:$0xff]
  %v125 = vld [vmem:[%s2 + $0x240] sm:$0xff]
  %v126 = vld [vmem:[%s2 + $0x248] sm:$0xff]
  %v127 = vld [vmem:[%s2 + $0x250] sm:$0xff]
  %v128 = vld [vmem:[%s2 + $0x258] sm:$0xff]
  %v129 = vld [vmem:[%s2 + $0x260] sm:$0xff]
  %v130 = vld [vmem:[%s2 + $0x268] sm:$0xff]
  %v131 = vld [vmem:[%s2 + $0x270] sm:$0xff]
  %v132 = vld [vmem:[%s2 + $0x278] sm:$0xff]
  %v133 = vld [vmem:[%s2 + $0x280] sm:$0xff]
  %v134 = vld [vmem:[%s2 + $0x288] sm:$0xff]
  %v135 = vld [vmem:[%s2 + $0x290] sm:$0xff]
  %v136 = vld [vmem:[%s2 + $0x298] sm:$0xff]
  %v137 = vld [vmem:[%s2 + $0x2a0] sm:$0xff]
  %v138 = vld [vmem:[%s2 + $0x2a8] sm:$0xff]
  %v139 = vld [vmem:[%s2 + $0x2b0] sm:$0xff]
  %v140 = vld [vmem:[%s2 + $0x2b8] sm:$0xff]
  %v141 = vld [vmem:[%s2 + $0x2c0] sm:$0xff]
  %v142 = vld [vmem:[%s2 + $0x2c8] sm:$0xff]
  %v143 = vld [vmem:[%s2 + $0x2d0] sm:$0xff]
  %v144 = vld [vmem:[%s2 + $0x2d8] sm:$0xff]
  %v145 = vld [vmem:[%s2 + $0x2e0] sm:$0xff]
  %v146 = vld [vmem:[%s2 + $0x2e8] sm:$0xff]
  %v147 = vld [vmem:[%s2 + $0x2f0] sm:$0xff]
  %v148 = vld [vmem:[%s2 + $0x2f8] sm:$0xff]
  %v149 = vld [vmem:[%s2 + $0x300] sm:$0xff]
  %v150 = vld [vmem:[%s2 + $0x308] sm:$0xff]
  %v151 = vld [vmem:[%s2 + $0x310] sm:$0xff]
  %v152 = vld [vmem:[%s2 + $0x318] sm:$0xff]
  %v153 = vld [vmem:[%s2 + $0x320] sm:$0xff]
  %v154 = vld [vmem:[%s2 + $0x328] sm:$0xff]
  %v155 = vld [vmem:[%s2 + $0x330] sm:$0xff]
  %v156 = vld [vmem:[%s2 + $0x338] sm:$0xff]
  %v157 = vld [vmem:[%s2 + $0x340] sm:$0xff]
  %v158 = vld [vmem:[%s2 + $0x348] sm:$0xff]
  %v159 = vld [vmem:[%s2 + $0x350] sm:$0xff]
  %v160 = vld [vmem:[%s2 + $0x358] sm:$0xff]
  %v161 = vld [vmem:[%s2 + $0x360] sm:$0xff]
  %v162 = vld [vmem:[%s2 + $0x368] sm:$0xff]
  %v163 = vld [vmem:[%s2 + $0x370] sm:$0xff]
  %v164 = vld [vmem:[%s2 + $0x378] sm:$0xff]
  %v165 = vld [vmem:[%s2 + $0x380] sm:$0xff]
  %v166 = vld [vmem:[%s2 + $0x388] sm:$0xff]
  %v167 = vld [vmem:[%s2 + $0x390] sm:$0xff]
  %v168 = vld [vmem:[%s2 + $0x398] sm:$0xff]
  %v169 = vld [vmem:[%s2 + $0x3a0] sm:$0xff]
  %v170 = vld [vmem:[%s2 + $0x3a8] sm:$0xff]
  %v171 = vld [vmem:[%s2 + $0x3b0] sm:$0xff]
  %v172 = vld [vmem:[%s2 + $0x3b8] sm:$0xff]
  %v173 = vld [vmem:[%s2 + $0x3c0] sm:$0xff]
  %v174 = vld [vmem:[%s2 + $0x3c8] sm:$0xff]
  %v175 = vld [vmem:[%s2 + $0x3d0] sm:$0xff]
  %v176 = vld [vmem:[%s2 + $0x3d8] sm:$0xff]
  %v177 = vld [vmem:[%s2 + $0x3e0] sm:$0xff]
  %v178 = vld [vmem:[%s2 + $0x3e8] sm:$0xff]
  %v179 = vld [vmem:[%s2 + $0x3f0] sm:$0xff]
  %v180 = vld [vmem:[%s2 + $0x3f8] sm:$0xff]
  %v181 = vld [vmem:[%s2 + $0x400] sm:$0xff]
  %v182 = vld [vmem:[%s2 + $0x408] sm:$0xff]
  %v183 = vld [vmem:[%s2 + $0x410] sm:$0xff]
  %v184 = vld [vmem:[%s2 + $0x418] sm:$0xff]
  %v185 = vld [vmem:[%s2 + $0x420] sm:$0xff]
  %v186 = vld [vmem:[%s2 + $0x428] sm:$0xff]
  %v187 = vld [vmem:[%s2 + $0x430] sm:$0xff]
  %v188 = vld [vmem:[%s2 + $0x438] sm:$0xff]
  %v189 = vld [vmem:[%s2 + $0x440] sm:$0xff]
  %v190 = vld [vmem:[%s2 + $0x448] sm:$0xff]
  %v191 = vld [vmem:[%s2 + $0x450] sm:$0xff]
  %v192 = vld [vmem:[%s2 + $0x458] sm:$0xff]
  %v193 = vld [vmem:[%s2 + $0x460] sm:$0xff]
  %v194 = vld [vmem:[%s2 + $0x468] sm:$0xff]
  %v195 = vld [vmem:[%s2 + $0x470] sm:$0xff]
  %v196 = vld [vmem:[%s2 + $0x478] sm:$0xff]
  %v197 = vld [vmem:[%s2 + $0x480] sm:$0xff]
  %v198 = vld [vmem:[%s2 + $0x488] sm:$0xff]
  %v199 = vld [vmem:[%s2 + $0x490] sm:$0xff]
  %v200 = vld [vmem:[%s2 + $0x498] sm:$0xff]
  %v201 = vld [vmem:[%s2 + $0x4a0] sm:$0xff]
  %v202 = vld [vmem:[%s2 + $0x4a8] sm:$0xff]
  %v203 = vld [vmem:[%s2 + $0x4b0] sm:$0xff]
  %v204 = vld [vmem:[%s2 + $0x4b8] sm:$0xff]
  %v205 = vld [vmem:[%s2 + $0x4c0] sm:$0xff]
  %v206 = vld [vmem:[%s2 + $0x4c8] sm:$0xff]
  %v207 = vld [vmem:[%s2 + $0x4d0] sm:$0xff]
  %v208 = vld [vmem:[%s2 + $0x4d8] sm:$0xff]
  %v209 = vld [vmem:[%s2 + $0x4e0] sm:$0xff]
  %v210 = vld [vmem:[%s2 + $0x4e8] sm:$0xff]
  %v211 = vld [vmem:[%s2 + $0x4f0] sm:$0xff]
  %v212 = vld [vmem:[%s2 + $0x4f8] sm:$0xff]
  %v213 = vld [vmem:[%s2 + $0x500] sm:$0xff]
  %v214 = vld [vmem:[%s2 + $0x508] sm:$0xff]
  %v215 = vld [vmem:[%s2 + $0x510] sm:$0xff]
  %v216 = vld [vmem:[%s2 + $0x518] sm:$0xff]
  %v217 = vld [vmem:[%s2 + $0x520] sm:$0xff]
  %v218 = vld [vmem:[%s2 + $0x528] sm:$0xff]
  %v219 = vld [vmem:[%s2 + $0x530] sm:$0xff]
  %v220 = vld [vmem:[%s2 + $0x538] sm:$0xff]
  %v221 = vld [vmem:[%s2 + $0x540] sm:$0xff]
  %v222 = vld [vmem:[%s2 + $0x548] sm:$0xff]
  %v223 = vld [vmem:[%s2 + $0x550] sm:$0xff]
  %v224 = vld [vmem:[%s2 + $0x558] sm:$0xff]
  %v225 = vld [vmem:[%s2 + $0x560] sm:$0xff]
  %v226 = vld [vmem:[%s2 + $0x568] sm:$0xff]
  %v227 = vld [vmem:[%s2 + $0x570] sm:$0xff]
  %v228 = vld [vmem:[%s2 + $0x578] sm:$0xff]
  %v229 = vld [vmem:[%s2 + $0x580] sm:$0xff]
  %v230 = vld [vmem:[%s2 + $0x588] sm:$0xff]
  %v231 = vld [vmem:[%s2 + $0x590] sm:$0xff]
  %v232 = vld [vmem:[%s2 + $0x598] sm:$0xff]
  %v233 = vld [vmem:[%s2 + $0x5a0] sm:$0xff]
  %v234 = vld [vmem:[%s2 + $0x5a8] sm:$0xff]
  %v235 = vld [vmem:[%s2 + $0x5b0] sm:$0xff]
  %v236 = vld [vmem:[%s2 + $0x5b8] sm:$0xff]
  %v237 = vld [vmem:[%s2 + $0x5c0] sm:$0xff]
  %v238 = vld [vmem:[%s2 + $0x5c8] sm:$0xff]
  %v239 = vld [vmem:[%s2 + $0x5d0] sm:$0xff]
  %v240 = vld [vmem:[%s2 + $0x5d8] sm:$0xff]
  %v241 = vld [vmem:[%s2 + $0x5e0] sm:$0xff]
  %v242 = vld [vmem:[%s2 + $0x5e8] sm:$0xff]
  %v243 = vld [vmem:[%s2 + $0x5f0] sm:$0xff]
  %v244 = vld [vmem:[%s2 + $0x5f8] sm:$0xff]
  %v245 = vld [vmem:[%s2 + $0x600] sm:$0xff]
  %v246 = vld [vmem:[%s2 + $0x608] sm:$0xff]
  %v247 = vld [vmem:[%s2 + $0x610] sm:$0xff]
  %v248 = vld [vmem:[%s2 + $0x618] sm:$0xff]
  %v249 = vld [vmem:[%s2 + $0x620] sm:$0xff]
  %v250 = vld [vmem:[%s2 + $0x628] sm:$0xff]
  %v251 = vld [vmem:[%s2 + $0x630] sm:$0xff]
  %v252 = vld [vmem:[%s2 + $0x638] sm:$0xff]
  %v253 = vld [vmem:[%s2 + $0x640] sm:$0xff]
  %v254 = vld [vmem:[%s2 + $0x648] sm:$0xff]
  %v255 = vld [vmem:[%s2 + $0x650] sm:$0xff]
  %v256 = vld [vmem:[%s2 + $0x658] sm:$0xff]
  %v257 = vld [vmem:[%s2 + $0x660] sm:$0xff]
  %v258 = vld [vmem:[%s2 + $0x668] sm:$0xff]
  %v259 = vld [vmem:[%s2 + $0x670] sm:$0xff]
  %v260 = vld [vmem:[%s2 + $0x678] sm:$0xff]
  %v261 = vld [vmem:[%s2 + $0x680] sm:$0xff]
  %v262 = vld [vmem:[%s2 + $0x688] sm:$0xff]
  %v263 = vld [vmem:[%s2 + $0x690] sm:$0xff]
  %v264 = vld [vmem:[%s2 + $0x698] sm:$0xff]
  %v265 = vld [vmem:[%s2 + $0x6a0] sm:$0xff]
  %v266 = vld [vmem:[%s2 + $0x6a8] sm:$0xff]
  %v267 = vld [vmem:[%s2 + $0x6b0] sm:$0xff]
  %v268 = vld [vmem:[%s2 + $0x6b8] sm:$0xff]
  %v269 = vld [vmem:[%s2 + $0x6c0] sm:$0xff]
  %v270 = vld [vmem:[%s2 + $0x6c8] sm:$0xff]
  %v271 = vld [vmem:[%s2 + $0x6d0] sm:$0xff]
  %v272 = vld [vmem:[%s2 + $0x6d8] sm:$0xff]
  %v273 = vld [vmem:[%s2 + $0x6e0] sm:$0xff]
  %v274 = vld [vmem:[%s2 + $0x6e8] sm:$0xff]
  %v275 = vld [vmem:[%s2 + $0x6f0] sm:$0xff]
  %v276 = vld [vmem:[%s2 + $0x6f8] sm:$0xff]
  %v277 = vld [vmem:[%s2 + $0x700] sm:$0xff]
  %v278 = vld [vmem:[%s2 + $0x708] sm:$0xff]
  %v279 = vld [vmem:[%s2 + $0x710] sm:$0xff]
  %v280 = vld [vmem:[%s2 + $0x718] sm:$0xff]
  %v281 = vld [vmem:[%s2 + $0x720] sm:$0xff]
  %v282 = vld [vmem:[%s2 + $0x728] sm:$0xff]
  %v283 = vld [vmem:[%s2 + $0x730] sm:$0xff]
  %v284 = vld [vmem:[%s2 + $0x738] sm:$0xff]
  %v285 = vld [vmem:[%s2 + $0x740] sm:$0xff]
  %v286 = vld [vmem:[%s2 + $0x748] sm:$0xff]
  %v287 = vld [vmem:[%s2 + $0x750] sm:$0xff]
  %v288 = vld [vmem:[%s2 + $0x758] sm:$0xff]
  %v289 = vld [vmem:[%s2 + $0x760] sm:$0xff]
  %v290 = vld [vmem:[%s2 + $0x768] sm:$0xff]
  %v291 = vld [vmem:[%s2 + $0x770] sm:$0xff]
  %v292 = vld [vmem:[%s2 + $0x778] sm:$0xff]
  %v293 = vld [vmem:[%s2 + $0x780] sm:$0xff]
  %v294 = vld [vmem:[%s2 + $0x788] sm:$0xff]
  %v295 = vld [vmem:[%s2 + $0x790] sm:$0xff]
  %v296 = vld [vmem:[%s2 + $0x798] sm:$0xff]
  %v297 = vld [vmem:[%s2 + $0x7a0] sm:$0xff]
  %v298 = vld [vmem:[%s2 + $0x7a8] sm:$0xff]
  %v299 = vld [vmem:[%s2 + $0x7b0] sm:$0xff]
  %v300 = vld [vmem:[%s2 + $0x7b8] sm:$0xff]
  %v301 = vld [vmem:[%s2 + $0x7c0] sm:$0xff]
  %v302 = vld [vmem:[%s2 + $0x7c8] sm:$0xff]
  %v303 = vld [vmem:[%s2 + $0x7d0] sm:$0xff]
  %v304 = vld [vmem:[%s2 + $0x7d8] sm:$0xff]
  %v305 = vld [vmem:[%s2 + $0x7e0] sm:$0xff]
  %v306 = vld [vmem:[%s2 + $0x7e8] sm:$0xff]
  %v307 = vld [vmem:[%s2 + $0x7f0] sm:$0xff]
  %v308 = vld [vmem:[%s2 + $0x7f8] sm:$0xff]
  %v309 = vld [vmem:[%s2 + $0x800] sm:$0xff]
  %v310 = vld [vmem:[%s2 + $0x808] sm:$0xff]
  %v311 = vld [vmem:[%s2 + $0x810] sm:$0xff]
  %v312 = vld [vmem:[%s2 + $0x818] sm:$0xff]
  %v313 = vld [vmem:[%s2 + $0x820] sm:$0xff]
  %v314 = vld [vmem:[%s2 + $0x828] sm:$0xff]
  %v315 = vld [vmem:[%s2 + $0x830] sm:$0xff]
  %v316 = vld [vmem:[%s2 + $0x838] sm:$0xff]
  %v317 = vld [vmem:[%s2 + $0x840] sm:$0xff]
  %v318 = vld [vmem:[%s2 + $0x848] sm:$0xff]
  %v319 = vld [vmem:[%s2 + $0x850] sm:$0xff]
  %v320 = vld [vmem:[%s2 + $0x858] sm:$0xff]
  %v321 = vld [vmem:[%s2 + $0x860] sm:$0xff]
  %v322 = vld [vmem:[%s2 + $0x868] sm:$0xff]
  %v323 = vld [vmem:[%s2 + $0x870] sm:$0xff]
  %v324 = vld [vmem:[%s2 + $0x878] sm:$0xff]
  %v325 = vld [vmem:[%s2 + $0x880] sm:$0xff]
  %v326 = vld [vmem:[%s2 + $0x888] sm:$0xff]
  %v327 = vld [vmem:[%s2 + $0x890] sm:$0xff]
  %v328 = vld [vmem:[%s2 + $0x898] sm:$0xff]
  %v329 = vld [vmem:[%s2 + $0x8a0] sm:$0xff]
  %v330 = vld [vmem:[%s2 + $0x8a8] sm:$0xff]
  %v331 = vld [vmem:[%s2 + $0x8b0] sm:$0xff]
  %v332 = vld [vmem:[%s2 + $0x8b8] sm:$0xff]
  %v333 = vld [vmem:[%s2 + $0x8c0] sm:$0xff]
  %v334 = vld [vmem:[%s2 + $0x8c8] sm:$0xff]
  %v335 = vld [vmem:[%s2 + $0x8d0] sm:$0xff]
  %v336 = vld [vmem:[%s2 + $0x8d8] sm:$0xff]
  %v337 = vld [vmem:[%s2 + $0x8e0] sm:$0xff]
  %v338 = vld [vmem:[%s2 + $0x8e8] sm:$0xff]
  %v339 = vld [vmem:[%s2 + $0x8f0] sm:$0xff]
  %v340 = vld [vmem:[%s2 + $0x8f8] sm:$0xff]
  %v341 = vld [vmem:[%s3] sm:$0x1]
  %v343 = vperm.slane %v341, 0
  %345 = vmatpush.msra.mxu0 %v68
  %346 = vmatpush.msra.mxu0 %v67
  %347 = vmatpush.msra.mxu0 %v66
  %348 = vmatpush.msra.mxu0 %v65
  %349 = vmatpush.msra.mxu0 %v64
  %350 = vmatpush.msra.mxu0 %v63
  %351 = vmatpush.msra.mxu0 %v62
  %352 = vmatpush.msra.mxu0 %v61
  %353 = vmatpush.msra.mxu0 %v60
  %354 = vmatpush.msra.mxu0 %v59
  %355 = vmatpush.msra.mxu0 %v58
  %356 = vmatpush.msra.mxu0 %v57
  %357 = vmatpush.msra.mxu0 %v56
  %358 = vmatpush.msra.mxu0 %v55
  %359 = vmatpush.msra.mxu0 %v54
  %360 = vmatpush.msra.mxu0 %v53
  %361 = vmatmul.f32.gmra.mxu0 %v35
  %v362 = vpop.f32.mrf.mxu0
  %v363 = vadd.f32 %v343, %v362
  %364 = vdwg.mxu0
  %365 = vmatpush.msra.mxu0 %v84
  %366 = vmatpush.msra.mxu0 %v83
  %367 = vmatpush.msra.mxu0 %v82
  %368 = vmatpush.msra.mxu0 %v81
  %369 = vmatpush.msra.mxu0 %v80
  %370 = vmatpush.msra.mxu0 %v79
  %371 = vmatpush.msra.mxu0 %v78
  %372 = vmatpush.msra.mxu0 %v77
  %373 = vmatpush.msra.mxu0 %v76
  %374 = vmatpush.msra.mxu0 %v75
  %375 = vmatpush.msra.mxu0 %v74
  %376 = vmatpush.msra.mxu0 %v73
  %377 = vmatpush.msra.mxu0 %v72
  %378 = vmatpush.msra.mxu0 %v71
  %379 = vmatpush.msra.mxu0 %v70
  %380 = vmatpush.msra.mxu0 %v69
  %381 = vmatmul.f32.gmra.mxu0 %v36
  %v382 = vpop.f32.mrf.mxu0
  %v383 = vadd.f32 %v363, %v382
  %384 = vdwg.mxu0
  %385 = vmatpush.msra.mxu0 %v100
  %386 = vmatpush.msra.mxu0 %v99
  %387 = vmatpush.msra.mxu0 %v98
  %388 = vmatpush.msra.mxu0 %v97
  %389 = vmatpush.msra.mxu0 %v96
  %390 = vmatpush.msra.mxu0 %v95
  %391 = vmatpush.msra.mxu0 %v94
  %392 = vmatpush.msra.mxu0 %v93
  %393 = vmatpush.msra.mxu0 %v92
  %394 = vmatpush.msra.mxu0 %v91
  %395 = vmatpush.msra.mxu0 %v90
  %396 = vmatpush.msra.mxu0 %v89
  %397 = vmatpush.msra.mxu0 %v88
  %398 = vmatpush.msra.mxu0 %v87
  %399 = vmatpush.msra.mxu0 %v86
  %400 = vmatpush.msra.mxu0 %v85
  %401 = vmatmul.f32.gmra.mxu0 %v37
  %v402 = vpop.f32.mrf.mxu0
  %v403 = vadd.f32 %v383, %v402
  %404 = vdwg.mxu0
  %405 = vmatpush.msra.mxu0 %v116
  %406 = vmatpush.msra.mxu0 %v115
  %407 = vmatpush.msra.mxu0 %v114
  %408 = vmatpush.msra.mxu0 %v113
  %409 = vmatpush.msra.mxu0 %v112
  %410 = vmatpush.msra.mxu0 %v111
  %411 = vmatpush.msra.mxu0 %v110
  %412 = vmatpush.msra.mxu0 %v109
  %413 = vmatpush.msra.mxu0 %v108
  %414 = vmatpush.msra.mxu0 %v107
  %415 = vmatpush.msra.mxu0 %v106
  %416 = vmatpush.msra.mxu0 %v105
  %417 = vmatpush.msra.mxu0 %v104
  %418 = vmatpush.msra.mxu0 %v103
  %419 = vmatpush.msra.mxu0 %v102
  %420 = vmatpush.msra.mxu0 %v101
  %421 = vmatmul.f32.gmra.mxu0 %v38
  %v422 = vpop.f32.mrf.mxu0
  %v423 = vadd.f32 %v403, %v422
  %424 = vdwg.mxu0
  %425 = vmatpush.msra.mxu0 %v132
  %426 = vmatpush.msra.mxu0 %v131
  %427 = vmatpush.msra.mxu0 %v130
  %428 = vmatpush.msra.mxu0 %v129
  %429 = vmatpush.msra.mxu0 %v128
  %430 = vmatpush.msra.mxu0 %v127
  %431 = vmatpush.msra.mxu0 %v126
  %432 = vmatpush.msra.mxu0 %v125
  %433 = vmatpush.msra.mxu0 %v124
  %434 = vmatpush.msra.mxu0 %v123
  %435 = vmatpush.msra.mxu0 %v122
  %436 = vmatpush.msra.mxu0 %v121
  %437 = vmatpush.msra.mxu0 %v120
  %438 = vmatpush.msra.mxu0 %v119
  %439 = vmatpush.msra.mxu0 %v118
  %440 = vmatpush.msra.mxu0 %v117
  %441 = vmatmul.f32.gmra.mxu0 %v39
  %v442 = vpop.f32.mrf.mxu0
  %v443 = vadd.f32 %v423, %v442
  %444 = vdwg.mxu0
  %445 = vmatpush.msra.mxu0 %v148
  %446 = vmatpush.msra.mxu0 %v147
  %447 = vmatpush.msra.mxu0 %v146
  %448 = vmatpush.msra.mxu0 %v145
  %449 = vmatpush.msra.mxu0 %v144
  %450 = vmatpush.msra.mxu0 %v143
  %451 = vmatpush.msra.mxu0 %v142
  %452 = vmatpush.msra.mxu0 %v141
  %453 = vmatpush.msra.mxu0 %v140
  %454 = vmatpush.msra.mxu0 %v139
  %455 = vmatpush.msra.mxu0 %v138
  %456 = vmatpush.msra.mxu0 %v137
  %457 = vmatpush.msra.mxu0 %v136
  %458 = vmatpush.msra.mxu0 %v135
  %459 = vmatpush.msra.mxu0 %v134
  %460 = vmatpush.msra.mxu0 %v133
  %461 = vmatmul.f32.gmra.mxu0 %v40
  %v462 = vpop.f32.mrf.mxu0
  %v463 = vadd.f32 %v443, %v462
  %464 = vdwg.mxu0
  %465 = vmatpush.msra.mxu0 %v164
  %466 = vmatpush.msra.mxu0 %v163
  %467 = vmatpush.msra.mxu0 %v162
  %468 = vmatpush.msra.mxu0 %v161
  %469 = vmatpush.msra.mxu0 %v160
  %470 = vmatpush.msra.mxu0 %v159
  %471 = vmatpush.msra.mxu0 %v158
  %472 = vmatpush.msra.mxu0 %v157
  %473 = vmatpush.msra.mxu0 %v156
  %474 = vmatpush.msra.mxu0 %v155
  %475 = vmatpush.msra.mxu0 %v154
  %476 = vmatpush.msra.mxu0 %v153
  %477 = vmatpush.msra.mxu0 %v152
  %478 = vmatpush.msra.mxu0 %v151
  %479 = vmatpush.msra.mxu0 %v150
  %480 = vmatpush.msra.mxu0 %v149
  %481 = vmatmul.f32.gmra.mxu0 %v41
  %v482 = vpop.f32.mrf.mxu0
  %v483 = vadd.f32 %v463, %v482
  %484 = vdwg.mxu0
  %485 = vmatpush.msra.mxu0 %v180
  %486 = vmatpush.msra.mxu0 %v179
  %487 = vmatpush.msra.mxu0 %v178
  %488 = vmatpush.msra.mxu0 %v177
  %489 = vmatpush.msra.mxu0 %v176
  %490 = vmatpush.msra.mxu0 %v175
  %491 = vmatpush.msra.mxu0 %v174
  %492 = vmatpush.msra.mxu0 %v173
  %493 = vmatpush.msra.mxu0 %v172
  %494 = vmatpush.msra.mxu0 %v171
  %495 = vmatpush.msra.mxu0 %v170
  %496 = vmatpush.msra.mxu0 %v169
  %497 = vmatpush.msra.mxu0 %v168
  %498 = vmatpush.msra.mxu0 %v167
  %499 = vmatpush.msra.mxu0 %v166
  %500 = vmatpush.msra.mxu0 %v165
  %501 = vmatmul.f32.gmra.mxu0 %v42
  %v502 = vpop.f32.mrf.mxu0
  %v503 = vadd.f32 %v483, %v502
  %504 = vdwg.mxu0
  %505 = vmatpush.msra.mxu0 %v196
  %506 = vmatpush.msra.mxu0 %v195
  %507 = vmatpush.msra.mxu0 %v194
  %508 = vmatpush.msra.mxu0 %v193
  %509 = vmatpush.msra.mxu0 %v192
  %510 = vmatpush.msra.mxu0 %v191
  %511 = vmatpush.msra.mxu0 %v190
  %512 = vmatpush.msra.mxu0 %v189
  %513 = vmatpush.msra.mxu0 %v188
  %514 = vmatpush.msra.mxu0 %v187
  %515 = vmatpush.msra.mxu0 %v186
  %516 = vmatpush.msra.mxu0 %v185
  %517 = vmatpush.msra.mxu0 %v184
  %518 = vmatpush.msra.mxu0 %v183
  %519 = vmatpush.msra.mxu0 %v182
  %520 = vmatpush.msra.mxu0 %v181
  %521 = vmatmul.f32.gmra.mxu0 %v43
  %v522 = vpop.f32.mrf.mxu0
  %v523 = vadd.f32 %v503, %v522
  %524 = vdwg.mxu0
  %525 = vmatpush.msra.mxu0 %v212
  %526 = vmatpush.msra.mxu0 %v211
  %527 = vmatpush.msra.mxu0 %v210
  %528 = vmatpush.msra.mxu0 %v209
  %529 = vmatpush.msra.mxu0 %v208
  %530 = vmatpush.msra.mxu0 %v207
  %531 = vmatpush.msra.mxu0 %v206
  %532 = vmatpush.msra.mxu0 %v205
  %533 = vmatpush.msra.mxu0 %v204
  %534 = vmatpush.msra.mxu0 %v203
  %535 = vmatpush.msra.mxu0 %v202
  %536 = vmatpush.msra.mxu0 %v201
  %537 = vmatpush.msra.mxu0 %v200
  %538 = vmatpush.msra.mxu0 %v199
  %539 = vmatpush.msra.mxu0 %v198
  %540 = vmatpush.msra.mxu0 %v197
  %541 = vmatmul.f32.gmra.mxu0 %v44
  %v542 = vpop.f32.mrf.mxu0
  %v543 = vadd.f32 %v523, %v542
  %544 = vdwg.mxu0
  %545 = vmatpush.msra.mxu0 %v228
  %546 = vmatpush.msra.mxu0 %v227
  %547 = vmatpush.msra.mxu0 %v226
  %548 = vmatpush.msra.mxu0 %v225
  %549 = vmatpush.msra.mxu0 %v224
  %550 = vmatpush.msra.mxu0 %v223
  %551 = vmatpush.msra.mxu0 %v222
  %552 = vmatpush.msra.mxu0 %v221
  %553 = vmatpush.msra.mxu0 %v220
  %554 = vmatpush.msra.mxu0 %v219
  %555 = vmatpush.msra.mxu0 %v218
  %556 = vmatpush.msra.mxu0 %v217
  %557 = vmatpush.msra.mxu0 %v216
  %558 = vmatpush.msra.mxu0 %v215
  %559 = vmatpush.msra.mxu0 %v214
  %560 = vmatpush.msra.mxu0 %v213
  %561 = vmatmul.f32.gmra.mxu0 %v45
  %v562 = vpop.f32.mrf.mxu0
  %v563 = vadd.f32 %v543, %v562
  %564 = vdwg.mxu0
  %565 = vmatpush.msra.mxu0 %v244
  %566 = vmatpush.msra.mxu0 %v243
  %567 = vmatpush.msra.mxu0 %v242
  %568 = vmatpush.msra.mxu0 %v241
  %569 = vmatpush.msra.mxu0 %v240
  %570 = vmatpush.msra.mxu0 %v239
  %571 = vmatpush.msra.mxu0 %v238
  %572 = vmatpush.msra.mxu0 %v237
  %573 = vmatpush.msra.mxu0 %v236
  %574 = vmatpush.msra.mxu0 %v235
  %575 = vmatpush.msra.mxu0 %v234
  %576 = vmatpush.msra.mxu0 %v233
  %577 = vmatpush.msra.mxu0 %v232
  %578 = vmatpush.msra.mxu0 %v231
  %579 = vmatpush.msra.mxu0 %v230
  %580 = vmatpush.msra.mxu0 %v229
  %581 = vmatmul.f32.gmra.mxu0 %v46
  %v582 = vpop.f32.mrf.mxu0
  %v583 = vadd.f32 %v563, %v582
  %584 = vdwg.mxu0
  %585 = vmatpush.msra.mxu0 %v260
  %586 = vmatpush.msra.mxu0 %v259
  %587 = vmatpush.msra.mxu0 %v258
  %588 = vmatpush.msra.mxu0 %v257
  %589 = vmatpush.msra.mxu0 %v256
  %590 = vmatpush.msra.mxu0 %v255
  %591 = vmatpush.msra.mxu0 %v254
  %592 = vmatpush.msra.mxu0 %v253
  %593 = vmatpush.msra.mxu0 %v252
  %594 = vmatpush.msra.mxu0 %v251
  %595 = vmatpush.msra.mxu0 %v250
  %596 = vmatpush.msra.mxu0 %v249
  %597 = vmatpush.msra.mxu0 %v248
  %598 = vmatpush.msra.mxu0 %v247
  %599 = vmatpush.msra.mxu0 %v246
  %600 = vmatpush.msra.mxu0 %v245
  %601 = vmatmul.f32.gmra.mxu0 %v47
  %v602 = vpop.f32.mrf.mxu0
  %v603 = vadd.f32 %v583, %v602
  %604 = vdwg.mxu0
  %605 = vmatpush.msra.mxu0 %v276
  %606 = vmatpush.msra.mxu0 %v275
  %607 = vmatpush.msra.mxu0 %v274
  %608 = vmatpush.msra.mxu0 %v273
  %609 = vmatpush.msra.mxu0 %v272
  %610 = vmatpush.msra.mxu0 %v271
  %611 = vmatpush.msra.mxu0 %v270
  %612 = vmatpush.msra.mxu0 %v269
  %613 = vmatpush.msra.mxu0 %v268
  %614 = vmatpush.msra.mxu0 %v267
  %615 = vmatpush.msra.mxu0 %v266
  %616 = vmatpush.msra.mxu0 %v265
  %617 = vmatpush.msra.mxu0 %v264
  %618 = vmatpush.msra.mxu0 %v263
  %619 = vmatpush.msra.mxu0 %v262
  %620 = vmatpush.msra.mxu0 %v261
  %621 = vmatmul.f32.gmra.mxu0 %v48
  %v622 = vpop.f32.mrf.mxu0
  %v623 = vadd.f32 %v603, %v622
  %624 = vdwg.mxu0
  %625 = vmatpush.msra.mxu0 %v292
  %626 = vmatpush.msra.mxu0 %v291
  %627 = vmatpush.msra.mxu0 %v290
  %628 = vmatpush.msra.mxu0 %v289
  %629 = vmatpush.msra.mxu0 %v288
  %630 = vmatpush.msra.mxu0 %v287
  %631 = vmatpush.msra.mxu0 %v286
  %632 = vmatpush.msra.mxu0 %v285
  %633 = vmatpush.msra.mxu0 %v284
  %634 = vmatpush.msra.mxu0 %v283
  %635 = vmatpush.msra.mxu0 %v282
  %636 = vmatpush.msra.mxu0 %v281
  %637 = vmatpush.msra.mxu0 %v280
  %638 = vmatpush.msra.mxu0 %v279
  %639 = vmatpush.msra.mxu0 %v278
  %640 = vmatpush.msra.mxu0 %v277
  %641 = vmatmul.f32.gmra.mxu0 %v49
  %v642 = vpop.f32.mrf.mxu0
  %v643 = vadd.f32 %v623, %v642
  %644 = vdwg.mxu0
  %645 = vmatpush.msra.mxu0 %v308
  %646 = vmatpush.msra.mxu0 %v307
  %647 = vmatpush.msra.mxu0 %v306
  %648 = vmatpush.msra.mxu0 %v305
  %649 = vmatpush.msra.mxu0 %v304
  %650 = vmatpush.msra.mxu0 %v303
  %651 = vmatpush.msra.mxu0 %v302
  %652 = vmatpush.msra.mxu0 %v301
  %653 = vmatpush.msra.mxu0 %v300
  %654 = vmatpush.msra.mxu0 %v299
  %655 = vmatpush.msra.mxu0 %v298
  %656 = vmatpush.msra.mxu0 %v297
  %657 = vmatpush.msra.mxu0 %v296
  %658 = vmatpush.msra.mxu0 %v295
  %659 = vmatpush.msra.mxu0 %v294
  %660 = vmatpush.msra.mxu0 %v293
  %661 = vmatmul.f32.gmra.mxu0 %v50
  %v662 = vpop.f32.mrf.mxu0
  %v663 = vadd.f32 %v643, %v662
  %664 = vdwg.mxu0
  %665 = vmatpush.msra.mxu0 %v324
  %666 = vmatpush.msra.mxu0 %v323
  %667 = vmatpush.msra.mxu0 %v322
  %668 = vmatpush.msra.mxu0 %v321
  %669 = vmatpush.msra.mxu0 %v320
  %670 = vmatpush.msra.mxu0 %v319
  %671 = vmatpush.msra.mxu0 %v318
  %672 = vmatpush.msra.mxu0 %v317
  %673 = vmatpush.msra.mxu0 %v316
  %674 = vmatpush.msra.mxu0 %v315
  %675 = vmatpush.msra.mxu0 %v314
  %676 = vmatpush.msra.mxu0 %v313
  %677 = vmatpush.msra.mxu0 %v312
  %678 = vmatpush.msra.mxu0 %v311
  %679 = vmatpush.msra.mxu0 %v310
  %680 = vmatpush.msra.mxu0 %v309
  %681 = vmatmul.f32.gmra.mxu0 %v51
  %v682 = vpop.f32.mrf.mxu0
  %v683 = vadd.f32 %v663, %v682
  %684 = vdwg.mxu0
  %685 = vmatpush.msra.mxu0 %v340
  %686 = vmatpush.msra.mxu0 %v339
  %687 = vmatpush.msra.mxu0 %v338
  %688 = vmatpush.msra.mxu0 %v337
  %689 = vmatpush.msra.mxu0 %v336
  %690 = vmatpush.msra.mxu0 %v335
  %691 = vmatpush.msra.mxu0 %v334
  %692 = vmatpush.msra.mxu0 %v333
  %693 = vmatpush.msra.mxu0 %v332
  %694 = vmatpush.msra.mxu0 %v331
  %695 = vmatpush.msra.mxu0 %v330
  %696 = vmatpush.msra.mxu0 %v329
  %697 = vmatpush.msra.mxu0 %v328
  %698 = vmatpush.msra.mxu0 %v327
  %699 = vmatpush.msra.mxu0 %v326
  %700 = vmatpush.msra.mxu0 %v325
  %701 = vmatmul.f32.gmra.mxu0 %v52
  %v702 = vpop.f32.mrf.mxu0
  %v703 = vadd.f32 %v683, %v702
  %704 = vdwg.mxu0
  %v705 = vld [vmem:[%s1] sm:$0xff]
  %v706 = vld [vmem:[%s1 + $0x8] sm:$0xff]
  %v707 = vld [vmem:[%s1 + $0x10] sm:$0xff]
  %v708 = vld [vmem:[%s1 + $0x18] sm:$0xff]
  %v709 = vld [vmem:[%s1 + $0x20] sm:$0xff]
  %v710 = vld [vmem:[%s1 + $0x28] sm:$0xff]
  %v711 = vld [vmem:[%s1 + $0x30] sm:$0xff]
  %v712 = vlaneseq
  %v713 = vand.u32 %v712, 127
  %714 = vset.pattern.permute.xlu0 0
  %715 = vperm.xlu0 %714, %v705
  %v716 = vpop.permute.xlu0 %715
  %717 = vset.pattern.permute.xlu0 0
  %718 = vperm.xlu0 %717, %v706
  %v719 = vpop.permute.xlu0 %718
  %720 = vset.pattern.permute.xlu0 0
  %721 = vperm.xlu0 %720, %v707
  %v722 = vpop.permute.xlu0 %721
  %723 = vset.pattern.permute.xlu0 0
  %724 = vperm.xlu0 %723, %v708
  %v725 = vpop.permute.xlu0 %724
  %726 = vset.pattern.permute.xlu0 0
  %727 = vperm.xlu0 %726, %v709
  %v728 = vpop.permute.xlu0 %727
  %729 = vset.pattern.permute.xlu0 0
  %730 = vperm.xlu0 %729, %v710
  %v731 = vpop.permute.xlu0 %730
  %732 = vset.pattern.permute.xlu0 0
  %733 = vperm.xlu0 %732, %v711
  %v734 = vpop.permute.xlu0 %733
  %vm735 = vcmp.eq.s32.totalorder %v716, %v713
  %vm736 = vcmp.eq.s32.totalorder %v719, %v713
  %vm737 = vcmp.eq.s32.totalorder %v722, %v713
  %vm738 = vcmp.eq.s32.totalorder %v725, %v713
  %vm739 = vcmp.eq.s32.totalorder %v728, %v713
  %vm740 = vcmp.eq.s32.totalorder %v731, %v713
  %vm741 = vcmp.eq.s32.totalorder %v734, %v713
  %v742 = vsel %vm735, 1, 0
  %v743 = vsel %vm736, 1, 0
  %v744 = vsel %vm737, 1, 0
  %v745 = vsel %vm738, 1, 0
  %v746 = vsel %vm739, 1, 0
  %v747 = vsel %vm740, 1, 0
  %v748 = vsel %vm741, 1, 0
  %v749 = vcvt.s32.f32 %v742
  %v750 = vcvt.s32.f32 %v743
  %v751 = vcvt.s32.f32 %v744
  %v752 = vcvt.s32.f32 %v745
  %v753 = vcvt.s32.f32 %v746
  %v754 = vcvt.s32.f32 %v747
  %v755 = vcvt.s32.f32 %v748
  %v756 = vld [vmem:[%s4] sm:$0xff]
  %v757 = vld [vmem:[%s4 + $0x8] sm:$0xff]
  %vm758 = vcmask 130048
  %v760 = vsel %vm758, %v749, 0
  %v763 = vsel %vm758, %v750, 0
  %v766 = vsel %vm758, %v751, 0
  %v769 = vsel %vm758, %v752, 0
  %v772 = vsel %vm758, %v753, 0
  %v775 = vsel %vm758, %v754, 0
  %v778 = vsel %vm758, %v755, 0
  %780 = vmatpush.msra.mxu0 0.0
  %781 = vmatpush.msra.mxu0 0.0
  %782 = vmatpush.msra.mxu0 0.0
  %783 = vmatpush.msra.mxu0 0.0
  %784 = vmatpush.msra.mxu0 0.0
  %785 = vmatpush.msra.mxu0 0.0
  %786 = vmatpush.msra.mxu0 0.0
  %787 = vmatpush.msra.mxu0 0.0
  %788 = vmatpush.msra.mxu0 0.0
  %789 = vmatpush.msra.mxu0 0.0
  %790 = vmatpush.msra.mxu0 0.0
  %791 = vmatpush.msra.mxu0 0.0
  %792 = vmatpush.msra.mxu0 0.0
  %793 = vmatpush.msra.mxu0 0.0
  %794 = vmatpush.msra.mxu0 %v757
  %795 = vmatpush.msra.mxu0 %v756
  %796 = vmatmul.f32.gmra.mxu0 %v760
  %v797 = vpop.f32.mrf.mxu0
  %v798 = vadd.f32 0.0, %v797
  %799 = vmatmul.f32.gmra.mxu0 %v763
  %v800 = vpop.f32.mrf.mxu0
  %v801 = vadd.f32 0.0, %v800
  %802 = vmatmul.f32.gmra.mxu0 %v766
  %v803 = vpop.f32.mrf.mxu0
  %v804 = vadd.f32 0.0, %v803
  %805 = vmatmul.f32.gmra.mxu0 %v769
  %v806 = vpop.f32.mrf.mxu0
  %v807 = vadd.f32 0.0, %v806
  %808 = vmatmul.f32.gmra.mxu0 %v772
  %v809 = vpop.f32.mrf.mxu0
  %v810 = vadd.f32 0.0, %v809
  %811 = vmatmul.f32.gmra.mxu0 %v775
  %v812 = vpop.f32.mrf.mxu0
  %v813 = vadd.f32 0.0, %v812
  %814 = vmatmul.f32.gmra.mxu0 %v778
  %v815 = vpop.f32.mrf.mxu0
  %v816 = vadd.f32 0.0, %v815
  %817 = vdwg.mxu0
  %v818 = vld [vmem:[%s5] sm:$0xff]
  %v819 = vld [vmem:[%s5 + $0x8] sm:$0xff]
  %v820 = vld [vmem:[%s7] sm:$0x1]
  %v822 = vperm.slane %v820, 0
  %v825 = vsel %vm758, %v798, 0
  %v828 = vsel %vm758, %v801, 0
  %v831 = vsel %vm758, %v804, 0
  %v834 = vsel %vm758, %v807, 0
  %v837 = vsel %vm758, %v810, 0
  %v840 = vsel %vm758, %v813, 0
  %v843 = vsel %vm758, %v816, 0
  %845 = vmatpush.msra.mxu0 0.0
  %846 = vmatpush.msra.mxu0 0.0
  %847 = vmatpush.msra.mxu0 0.0
  %848 = vmatpush.msra.mxu0 0.0
  %849 = vmatpush.msra.mxu0 0.0
  %850 = vmatpush.msra.mxu0 0.0
  %851 = vmatpush.msra.mxu0 0.0
  %852 = vmatpush.msra.mxu0 0.0
  %853 = vmatpush.msra.mxu0 0.0
  %854 = vmatpush.msra.mxu0 0.0
  %855 = vmatpush.msra.mxu0 0.0
  %856 = vmatpush.msra.mxu0 0.0
  %857 = vmatpush.msra.mxu0 0.0
  %858 = vmatpush.msra.mxu0 0.0
  %859 = vmatpush.msra.mxu0 %v819
  %860 = vmatpush.msra.mxu0 %v818
  %861 = vmatmul.f32.gmra.mxu0 %v825
  %v862 = vpop.f32.mrf.mxu0
  %v863 = vadd.f32 %v822, %v862
  %864 = vmatmul.f32.gmra.mxu0 %v828
  %v865 = vpop.f32.mrf.mxu0
  %v866 = vadd.f32 %v822, %v865
  %867 = vmatmul.f32.gmra.mxu0 %v831
  %v868 = vpop.f32.mrf.mxu0
  %v869 = vadd.f32 %v822, %v868
  %870 = vmatmul.f32.gmra.mxu0 %v834
  %v871 = vpop.f32.mrf.mxu0
  %v872 = vadd.f32 %v822, %v871
  %873 = vmatmul.f32.gmra.mxu0 %v837
  %v874 = vpop.f32.mrf.mxu0
  %v875 = vadd.f32 %v822, %v874
  %876 = vmatmul.f32.gmra.mxu0 %v840
  %v877 = vpop.f32.mrf.mxu0
  %v878 = vadd.f32 %v822, %v877
  %879 = vmatmul.f32.gmra.mxu0 %v843
  %v880 = vpop.f32.mrf.mxu0
  %v881 = vadd.f32 %v822, %v880
  %882 = vdwg.mxu0
  %v883 = vld [vmem:[%s6] sm:$0xff]
  %v884 = vld [vmem:[%s6 + $0x8] sm:$0xff]
  %v885 = vld [vmem:[%s6 + $0x10] sm:$0xff]
  %v886 = vld [vmem:[%s6 + $0x18] sm:$0xff]
  %vm887 = vcmask 261120
  %v889 = vsel %vm887, %v703, 0
  %891 = vmatpush.msra.mxu0 0.0
  %892 = vmatpush.msra.mxu0 0.0
  %893 = vmatpush.msra.mxu0 0.0
  %894 = vmatpush.msra.mxu0 0.0
  %895 = vmatpush.msra.mxu0 0.0
  %896 = vmatpush.msra.mxu0 0.0
  %897 = vmatpush.msra.mxu0 0.0
  %898 = vmatpush.msra.mxu0 0.0
  %899 = vmatpush.msra.mxu0 0.0
  %900 = vmatpush.msra.mxu0 0.0
  %901 = vmatpush.msra.mxu0 0.0
  %902 = vmatpush.msra.mxu0 0.0
  %903 = vmatpush.msra.mxu0 %v886
  %904 = vmatpush.msra.mxu0 %v885
  %905 = vmatpush.msra.mxu0 %v884
  %906 = vmatpush.msra.mxu0 %v883
  %907 = vmatmul.f32.gmra.mxu0 %v889
  %v908 = vpop.f32.mrf.mxu0
  %v909 = vadd.f32 0.0, %v908
  %910 = vdwg.mxu0
  %v911 = vadd.f32 %v863, %v909
  %v912 = vxor.u32 %v911, 2147483648
  %v913 = vmul.f32 %v912, 1.442695
  %v914 = vpow.pop %v913
  %v915 = vadd.f32 %v914, 1.0
  %v916 = vrcp.pop %v915
  %v917 = vmul.f32 %v915, %v916
  %v918 = vsub.f32 1.0, %v917
  %v919 = vmul.f32 %v916, %v918
  %v920 = vadd.f32 %v916, %v919
  %vm921 = vweird.f32 %v915
  %vm922 = vweird.f32 %v916
  %vm923 = vmor %vm921, %vm922
  %v924 = vsel %vm923, %v916, %v920
  %v925 = vand.u32 2147483647, %v915
  %vm926 = vcmp.eq.f32.partialorder %v925, 8.507059e+37
  %v927 = vand.u32 %v915, 2147483648
  %v928 = vor.u32 1.1754944e-38, %v927
  %v929 = vsel %vm926, %v928, %v924
  %v930 = vmul.f32 1.0, %v929
  %v931 = vtanh.pop %v911
  %932 = vrot.lane.b32.xlu0 %v703, 32
  %v933 = vpop.permute.xlu0 %932
  %v935 = vmul.f32 %v930, %v933
  %937 = vrot.lane.b32.xlu0 %v931, 64
  %v938 = vpop.permute.xlu0 %937
  %v940 = vmul.f32 %v930, %v938
  %942 = vrot.lane.b32.xlu0 %v940, 32
  %v943 = vpop.permute.xlu0 %942
  %v945 = vadd.f32 %v935, %v943
  %v946 = vtanh.pop %v945
  %948 = vrot.lane.b32.xlu0 %v946, 64
  %v949 = vpop.permute.xlu0 %948
  %v951 = vmul.f32 %v930, %v949
  %953 = vrot.lane.b32.xlu0 %v951, 32
  %v954 = vpop.permute.xlu0 %953
  %v955 = vsel %vm887, %v954, 0
  %957 = vmatpush.msra.mxu0 0.0
  %958 = vmatpush.msra.mxu0 0.0
  %959 = vmatpush.msra.mxu0 0.0
  %960 = vmatpush.msra.mxu0 0.0
  %961 = vmatpush.msra.mxu0 0.0
  %962 = vmatpush.msra.mxu0 0.0
  %963 = vmatpush.msra.mxu0 0.0
  %964 = vmatpush.msra.mxu0 0.0
  %965 = vmatpush.msra.mxu0 0.0
  %966 = vmatpush.msra.mxu0 0.0
  %967 = vmatpush.msra.mxu0 0.0
  %968 = vmatpush.msra.mxu0 0.0
  %969 = vmatpush.msra.mxu0 %v886
  %970 = vmatpush.msra.mxu0 %v885
  %971 = vmatpush.msra.mxu0 %v884
  %972 = vmatpush.msra.mxu0 %v883
  %973 = vmatmul.f32.gmra.mxu0 %v955
  %v974 = vpop.f32.mrf.mxu0
  %v975 = vadd.f32 0.0, %v974
  %976 = vdwg.mxu0
  %v977 = vadd.f32 %v866, %v975
  %v978 = vxor.u32 %v977, 2147483648
  %v979 = vmul.f32 %v978, 1.442695
  %v980 = vpow.pop %v979
  %v981 = vadd.f32 %v980, 1.0
  %v982 = vrcp.pop %v981
  %v983 = vmul.f32 %v981, %v982
  %v984 = vsub.f32 1.0, %v983
  %v985 = vmul.f32 %v982, %v984
  %v986 = vadd.f32 %v982, %v985
  %vm987 = vweird.f32 %v981
  %vm988 = vweird.f32 %v982
  %vm989 = vmor %vm987, %vm988
  %v990 = vsel %vm989, %v982, %v986
  %v991 = vand.u32 2147483647, %v981
  %vm992 = vcmp.eq.f32.partialorder %v991, 8.507059e+37
  %v993 = vand.u32 %v981, 2147483648
  %v994 = vor.u32 1.1754944e-38, %v993
  %v995 = vsel %vm992, %v994, %v990
  %v996 = vmul.f32 1.0, %v995
  %v997 = vtanh.pop %v977
  %v998 = vmul.f32 %v996, %v945
  %1000 = vrot.lane.b32.xlu0 %v997, 64
  %v1001 = vpop.permute.xlu0 %1000
  %v1003 = vmul.f32 %v996, %v1001
  %1005 = vrot.lane.b32.xlu0 %v1003, 32
  %v1006 = vpop.permute.xlu0 %1005
  %v1008 = vadd.f32 %v998, %v1006
  %v1009 = vtanh.pop %v1008
  %1011 = vrot.lane.b32.xlu0 %v1009, 64
  %v1012 = vpop.permute.xlu0 %1011
  %v1014 = vmul.f32 %v996, %v1012
  %1016 = vrot.lane.b32.xlu0 %v1014, 32
  %v1017 = vpop.permute.xlu0 %1016
  %v1018 = vsel %vm887, %v1017, 0
  %1020 = vmatpush.msra.mxu0 0.0
  %1021 = vmatpush.msra.mxu0 0.0
  %1022 = vmatpush.msra.mxu0 0.0
  %1023 = vmatpush.msra.mxu0 0.0
  %1024 = vmatpush.msra.mxu0 0.0
  %1025 = vmatpush.msra.mxu0 0.0
  %1026 = vmatpush.msra.mxu0 0.0
  %1027 = vmatpush.msra.mxu0 0.0
  %1028 = vmatpush.msra.mxu0 0.0
  %1029 = vmatpush.msra.mxu0 0.0
  %1030 = vmatpush.msra.mxu0 0.0
  %1031 = vmatpush.msra.mxu0 0.0
  %1032 = vmatpush.msra.mxu0 %v886
  %1033 = vmatpush.msra.mxu0 %v885
  %1034 = vmatpush.msra.mxu0 %v884
  %1035 = vmatpush.msra.mxu0 %v883
  %1036 = vmatmul.f32.gmra.mxu0 %v1018
  %v1037 = vpop.f32.mrf.mxu0
  %v1038 = vadd.f32 0.0, %v1037
  %1039 = vdwg.mxu0
  %v1040 = vadd.f32 %v869, %v1038
  %v1041 = vxor.u32 %v1040, 2147483648
  %v1042 = vmul.f32 %v1041, 1.442695
  %v1043 = vpow.pop %v1042
  %v1044 = vadd.f32 %v1043, 1.0
  %v1045 = vrcp.pop %v1044
  %v1046 = vmul.f32 %v1044, %v1045
  %v1047 = vsub.f32 1.0, %v1046
  %v1048 = vmul.f32 %v1045, %v1047
  %v1049 = vadd.f32 %v1045, %v1048
  %vm1050 = vweird.f32 %v1044
  %vm1051 = vweird.f32 %v1045
  %vm1052 = vmor %vm1050, %vm1051
  %v1053 = vsel %vm1052, %v1045, %v1049
  %v1054 = vand.u32 2147483647, %v1044
  %vm1055 = vcmp.eq.f32.partialorder %v1054, 8.507059e+37
  %v1056 = vand.u32 %v1044, 2147483648
  %v1057 = vor.u32 1.1754944e-38, %v1056
  %v1058 = vsel %vm1055, %v1057, %v1053
  %v1059 = vmul.f32 1.0, %v1058
  %v1060 = vtanh.pop %v1040
  %v1061 = vmul.f32 %v1059, %v1008
  %1063 = vrot.lane.b32.xlu0 %v1060, 64
  %v1064 = vpop.permute.xlu0 %1063
  %v1066 = vmul.f32 %v1059, %v1064
  %1068 = vrot.lane.b32.xlu0 %v1066, 32
  %v1069 = vpop.permute.xlu0 %1068
  %v1071 = vadd.f32 %v1061, %v1069
  %v1072 = vtanh.pop %v1071
  %1074 = vrot.lane.b32.xlu0 %v1072, 64
  %v1075 = vpop.permute.xlu0 %1074
  %v1077 = vmul.f32 %v1059, %v1075
  %1079 = vrot.lane.b32.xlu0 %v1077, 32
  %v1080 = vpop.permute.xlu0 %1079
  %v1081 = vsel %vm887, %v1080, 0
  %1083 = vmatpush.msra.mxu0 0.0
  %1084 = vmatpush.msra.mxu0 0.0
  %1085 = vmatpush.msra.mxu0 0.0
  %1086 = vmatpush.msra.mxu0 0.0
  %1087 = vmatpush.msra.mxu0 0.0
  %1088 = vmatpush.msra.mxu0 0.0
  %1089 = vmatpush.msra.mxu0 0.0
  %1090 = vmatpush.msra.mxu0 0.0
  %1091 = vmatpush.msra.mxu0 0.0
  %1092 = vmatpush.msra.mxu0 0.0
  %1093 = vmatpush.msra.mxu0 0.0
  %1094 = vmatpush.msra.mxu0 0.0
  %1095 = vmatpush.msra.mxu0 %v886
  %1096 = vmatpush.msra.mxu0 %v885
  %1097 = vmatpush.msra.mxu0 %v884
  %1098 = vmatpush.msra.mxu0 %v883
  %1099 = vmatmul.f32.gmra.mxu0 %v1081
  %v1100 = vpop.f32.mrf.mxu0
  %v1101 = vadd.f32 0.0, %v1100
  %1102 = vdwg.mxu0
  %v1103 = vadd.f32 %v872, %v1101
  %v1104 = vxor.u32 %v1103, 2147483648
  %v1105 = vmul.f32 %v1104, 1.442695
  %v1106 = vpow.pop %v1105
  %v1107 = vadd.f32 %v1106, 1.0
  %v1108 = vrcp.pop %v1107
  %v1109 = vmul.f32 %v1107, %v1108
  %v1110 = vsub.f32 1.0, %v1109
  %v1111 = vmul.f32 %v1108, %v1110
  %v1112 = vadd.f32 %v1108, %v1111
  %vm1113 = vweird.f32 %v1107
  %vm1114 = vweird.f32 %v1108
  %vm1115 = vmor %vm1113, %vm1114
  %v1116 = vsel %vm1115, %v1108, %v1112
  %v1117 = vand.u32 2147483647, %v1107
  %vm1118 = vcmp.eq.f32.partialorder %v1117, 8.507059e+37
  %v1119 = vand.u32 %v1107, 2147483648
  %v1120 = vor.u32 1.1754944e-38, %v1119
  %v1121 = vsel %vm1118, %v1120, %v1116
  %v1122 = vmul.f32 1.0, %v1121
  %v1123 = vtanh.pop %v1103
  %v1124 = vmul.f32 %v1122, %v1071
  %1126 = vrot.lane.b32.xlu0 %v1123, 64
  %v1127 = vpop.permute.xlu0 %1126
  %v1129 = vmul.f32 %v1122, %v1127
  %1131 = vrot.lane.b32.xlu0 %v1129, 32
  %v1132 = vpop.permute.xlu0 %1131
  %v1134 = vadd.f32 %v1124, %v1132
  %v1135 = vtanh.pop %v1134
  %1137 = vrot.lane.b32.xlu0 %v1135, 64
  %v1138 = vpop.permute.xlu0 %1137
  %v1140 = vmul.f32 %v1122, %v1138
  %1142 = vrot.lane.b32.xlu0 %v1140, 32
  %v1143 = vpop.permute.xlu0 %1142
  %v1144 = vsel %vm887, %v1143, 0
  %1146 = vmatpush.msra.mxu0 0.0
  %1147 = vmatpush.msra.mxu0 0.0
  %1148 = vmatpush.msra.mxu0 0.0
  %1149 = vmatpush.msra.mxu0 0.0
  %1150 = vmatpush.msra.mxu0 0.0
  %1151 = vmatpush.msra.mxu0 0.0
  %1152 = vmatpush.msra.mxu0 0.0
  %1153 = vmatpush.msra.mxu0 0.0
  %1154 = vmatpush.msra.mxu0 0.0
  %1155 = vmatpush.msra.mxu0 0.0
  %1156 = vmatpush.msra.mxu0 0.0
  %1157 = vmatpush.msra.mxu0 0.0
  %1158 = vmatpush.msra.mxu0 %v886
  %1159 = vmatpush.msra.mxu0 %v885
  %1160 = vmatpush.msra.mxu0 %v884
  %1161 = vmatpush.msra.mxu0 %v883
  %1162 = vmatmul.f32.gmra.mxu0 %v1144
  %v1163 = vpop.f32.mrf.mxu0
  %v1164 = vadd.f32 0.0, %v1163
  %1165 = vdwg.mxu0
  %v1166 = vadd.f32 %v875, %v1164
  %v1167 = vxor.u32 %v1166, 2147483648
  %v1168 = vmul.f32 %v1167, 1.442695
  %v1169 = vpow.pop %v1168
  %v1170 = vadd.f32 %v1169, 1.0
  %v1171 = vrcp.pop %v1170
  %v1172 = vmul.f32 %v1170, %v1171
  %v1173 = vsub.f32 1.0, %v1172
  %v1174 = vmul.f32 %v1171, %v1173
  %v1175 = vadd.f32 %v1171, %v1174
  %vm1176 = vweird.f32 %v1170
  %vm1177 = vweird.f32 %v1171
  %vm1178 = vmor %vm1176, %vm1177
  %v1179 = vsel %vm1178, %v1171, %v1175
  %v1180 = vand.u32 2147483647, %v1170
  %vm1181 = vcmp.eq.f32.partialorder %v1180, 8.507059e+37
  %v1182 = vand.u32 %v1170, 2147483648
  %v1183 = vor.u32 1.1754944e-38, %v1182
  %v1184 = vsel %vm1181, %v1183, %v1179
  %v1185 = vmul.f32 1.0, %v1184
  %v1186 = vtanh.pop %v1166
  %v1187 = vmul.f32 %v1185, %v1134
  %1189 = vrot.lane.b32.xlu0 %v1186, 64
  %v1190 = vpop.permute.xlu0 %1189
  %v1192 = vmul.f32 %v1185, %v1190
  %1194 = vrot.lane.b32.xlu0 %v1192, 32
  %v1195 = vpop.permute.xlu0 %1194
  %v1197 = vadd.f32 %v1187, %v1195
  %v1198 = vtanh.pop %v1197
  %1200 = vrot.lane.b32.xlu0 %v1198, 64
  %v1201 = vpop.permute.xlu0 %1200
  %v1203 = vmul.f32 %v1185, %v1201
  %1205 = vrot.lane.b32.xlu0 %v1203, 32
  %v1206 = vpop.permute.xlu0 %1205
  %v1207 = vsel %vm887, %v1206, 0
  %1209 = vmatpush.msra.mxu0 0.0
  %1210 = vmatpush.msra.mxu0 0.0
  %1211 = vmatpush.msra.mxu0 0.0
  %1212 = vmatpush.msra.mxu0 0.0
  %1213 = vmatpush.msra.mxu0 0.0
  %1214 = vmatpush.msra.mxu0 0.0
  %1215 = vmatpush.msra.mxu0 0.0
  %1216 = vmatpush.msra.mxu0 0.0
  %1217 = vmatpush.msra.mxu0 0.0
  %1218 = vmatpush.msra.mxu0 0.0
  %1219 = vmatpush.msra.mxu0 0.0
  %1220 = vmatpush.msra.mxu0 0.0
  %1221 = vmatpush.msra.mxu0 %v886
  %1222 = vmatpush.msra.mxu0 %v885
  %1223 = vmatpush.msra.mxu0 %v884
  %1224 = vmatpush.msra.mxu0 %v883
  %1225 = vmatmul.f32.gmra.mxu0 %v1207
  %v1226 = vpop.f32.mrf.mxu0
  %v1227 = vadd.f32 0.0, %v1226
  %1228 = vdwg.mxu0
  %v1229 = vadd.f32 %v878, %v1227
  %v1230 = vxor.u32 %v1229, 2147483648
  %v1231 = vmul.f32 %v1230, 1.442695
  %v1232 = vpow.pop %v1231
  %v1233 = vadd.f32 %v1232, 1.0
  %v1234 = vrcp.pop %v1233
  %v1235 = vmul.f32 %v1233, %v1234
  %v1236 = vsub.f32 1.0, %v1235
  %v1237 = vmul.f32 %v1234, %v1236
  %v1238 = vadd.f32 %v1234, %v1237
  %vm1239 = vweird.f32 %v1233
  %vm1240 = vweird.f32 %v1234
  %vm1241 = vmor %vm1239, %vm1240
  %v1242 = vsel %vm1241, %v1234, %v1238
  %v1243 = vand.u32 2147483647, %v1233
  %vm1244 = vcmp.eq.f32.partialorder %v1243, 8.507059e+37
  %v1245 = vand.u32 %v1233, 2147483648
  %v1246 = vor.u32 1.1754944e-38, %v1245
  %v1247 = vsel %vm1244, %v1246, %v1242
  %v1248 = vmul.f32 1.0, %v1247
  %v1249 = vtanh.pop %v1229
  %v1250 = vmul.f32 %v1248, %v1197
  %1252 = vrot.lane.b32.xlu0 %v1249, 64
  %v1253 = vpop.permute.xlu0 %1252
  %v1255 = vmul.f32 %v1248, %v1253
  %1257 = vrot.lane.b32.xlu0 %v1255, 32
  %v1258 = vpop.permute.xlu0 %1257
  %v1260 = vadd.f32 %v1250, %v1258
  %v1261 = vtanh.pop %v1260
  %1263 = vrot.lane.b32.xlu0 %v1261, 64
  %v1264 = vpop.permute.xlu0 %1263
  %v1266 = vmul.f32 %v1248, %v1264
  %1268 = vrot.lane.b32.xlu0 %v1266, 32
  %v1269 = vpop.permute.xlu0 %1268
  %v1270 = vsel %vm887, %v1269, 0
  %1272 = vmatpush.msra.mxu0 0.0
  %1273 = vmatpush.msra.mxu0 0.0
  %1274 = vmatpush.msra.mxu0 0.0
  %1275 = vmatpush.msra.mxu0 0.0
  %1276 = vmatpush.msra.mxu0 0.0
  %1277 = vmatpush.msra.mxu0 0.0
  %1278 = vmatpush.msra.mxu0 0.0
  %1279 = vmatpush.msra.mxu0 0.0
  %1280 = vmatpush.msra.mxu0 0.0
  %1281 = vmatpush.msra.mxu0 0.0
  %1282 = vmatpush.msra.mxu0 0.0
  %1283 = vmatpush.msra.mxu0 0.0
  %1284 = vmatpush.msra.mxu0 %v886
  %1285 = vmatpush.msra.mxu0 %v885
  %1286 = vmatpush.msra.mxu0 %v884
  %1287 = vmatpush.msra.mxu0 %v883
  %1288 = vmatmul.f32.gmra.mxu0 %v1270
  %v1289 = vpop.f32.mrf.mxu0
  %v1290 = vadd.f32 0.0, %v1289
  %1291 = vdwg.mxu0
  %v1292 = vadd.f32 %v881, %v1290
  %v1293 = vxor.u32 %v1292, 2147483648
  %v1294 = vmul.f32 %v1293, 1.442695
  %v1295 = vpow.pop %v1294
  %v1296 = vadd.f32 %v1295, 1.0
  %v1297 = vrcp.pop %v1296
  %v1298 = vmul.f32 %v1296, %v1297
  %v1299 = vsub.f32 1.0, %v1298
  %v1300 = vmul.f32 %v1297, %v1299
  %v1301 = vadd.f32 %v1297, %v1300
  %vm1302 = vweird.f32 %v1296
  %vm1303 = vweird.f32 %v1297
  %vm1304 = vmor %vm1302, %vm1303
  %v1305 = vsel %vm1304, %v1297, %v1301
  %v1306 = vand.u32 2147483647, %v1296
  %vm1307 = vcmp.eq.f32.partialorder %v1306, 8.507059e+37
  %v1308 = vand.u32 %v1296, 2147483648
  %v1309 = vor.u32 1.1754944e-38, %v1308
  %v1310 = vsel %vm1307, %v1309, %v1305
  %v1311 = vmul.f32 1.0, %v1310
  %v1312 = vtanh.pop %v1292
  %v1313 = vmul.f32 %v1311, %v1260
  %1315 = vrot.lane.b32.xlu0 %v1312, 64
  %v1316 = vpop.permute.xlu0 %1315
  %v1318 = vmul.f32 %v1311, %v1316
  %1320 = vrot.lane.b32.xlu0 %v1318, 32
  %v1321 = vpop.permute.xlu0 %1320
  %v1323 = vadd.f32 %v1313, %v1321
  %v1324 = vtanh.pop %v1323
  %1326 = vrot.lane.b32.xlu0 %v1324, 64
  %v1327 = vpop.permute.xlu0 %1326
  %v1329 = vmul.f32 %v1311, %v1327
  %v1330 = vld [vmem:[%s8] sm:$0xff]
  %v1331 = vld [vmem:[%s8 + $0x8] sm:$0xff]
  %v1332 = vld [vmem:[%s8 + $0x10] sm:$0xff]
  %v1333 = vld [vmem:[%s8 + $0x18] sm:$0xff]
  %v1334 = vld [vmem:[%s9] sm:$0x1]
  %v1336 = vperm.slane %v1334, 0
  %1339 = vrot.lane.b32.xlu0 %v1329, 32
  %v1340 = vpop.permute.xlu0 %1339
  %v1341 = vsel %vm887, %v1340, 0
  %1343 = vmatpush.msra.mxu0 0.0
  %1344 = vmatpush.msra.mxu0 0.0
  %1345 = vmatpush.msra.mxu0 0.0
  %1346 = vmatpush.msra.mxu0 0.0
  %1347 = vmatpush.msra.mxu0 0.0
  %1348 = vmatpush.msra.mxu0 0.0
  %1349 = vmatpush.msra.mxu0 0.0
  %1350 = vmatpush.msra.mxu0 0.0
  %1351 = vmatpush.msra.mxu0 0.0
  %1352 = vmatpush.msra.mxu0 0.0
  %1353 = vmatpush.msra.mxu0 0.0
  %1354 = vmatpush.msra.mxu0 0.0
  %1355 = vmatpush.msra.mxu0 %v1333
  %1356 = vmatpush.msra.mxu0 %v1332
  %1357 = vmatpush.msra.mxu0 %v1331
  %1358 = vmatpush.msra.mxu0 %v1330
  %1359 = vmatmul.f32.gmra.mxu0 %v955
  %v1360 = vpop.f32.mrf.mxu0
  %v1361 = vadd.f32 %v1336, %v1360
  %1362 = vmatmul.f32.gmra.mxu0 %v1018
  %v1363 = vpop.f32.mrf.mxu0
  %v1364 = vadd.f32 %v1336, %v1363
  %1365 = vmatmul.f32.gmra.mxu0 %v1081
  %v1366 = vpop.f32.mrf.mxu0
  %v1367 = vadd.f32 %v1336, %v1366
  %1368 = vmatmul.f32.gmra.mxu0 %v1144
  %v1369 = vpop.f32.mrf.mxu0
  %v1370 = vadd.f32 %v1336, %v1369
  %1371 = vmatmul.f32.gmra.mxu0 %v1207
  %v1372 = vpop.f32.mrf.mxu0
  %v1373 = vadd.f32 %v1336, %v1372
  %1374 = vmatmul.f32.gmra.mxu0 %v1270
  %v1375 = vpop.f32.mrf.mxu0
  %v1376 = vadd.f32 %v1336, %v1375
  %1377 = vmatmul.f32.gmra.mxu0 %v1341
  %v1378 = vpop.f32.mrf.mxu0
  %v1379 = vadd.f32 %v1336, %v1378
  %1380 = vdwg.mxu0
  %1381 = vst [vmem:[%s10] sm:$0xff] %v1361
  %1382 = vst [vmem:[%s10 + $0x8] sm:$0xff] %v1364
  %1383 = vst [vmem:[%s10 + $0x10] sm:$0xff] %v1367
  %1384 = vst [vmem:[%s10 + $0x18] sm:$0xff] %v1370
  %1385 = vst [vmem:[%s10 + $0x20] sm:$0xff] %v1373
  %1386 = vst [vmem:[%s10 + $0x28] sm:$0xff] %v1376
  %1387 = vst [vmem:[%s10 + $0x30] sm:$0xff] %v1379
  // Predicated region
  $region42: #{bbox_caption_generator_forward.1} parent=0 // pred_check
    _
  $region43: #{bbox_caption_generator_forward.1} parent=0 // pred_check_branch
    %1389 = sbr.rel (0) target = $region45
  $region44: #{bbox_caption_generator_forward.1} parent=0 // pred_region
    _
  $region45: #{bbox_caption_generator_forward.1} parent=0 // pred_fallthru
    _
  // Predicated region
  $region46: #{bbox_caption_generator_forward.1} parent=0 // pred_check
    _
  $region47: #{bbox_caption_generator_forward.1} parent=0 // pred_check_branch
    %1391 = sbr.rel (0) target = $region49
  $region48: #{bbox_caption_generator_forward.1} parent=0 // pred_region
    _
  $region49: #{bbox_caption_generator_forward.1} parent=0 // pred_fallthru
    _

</llo_original>
